<compile_context>
chip_gen: v5e
topology: v5e:2x2
jax: 0.10.0
libtpu: 0.0.40
codegen_flags: <defaults>
</compile_context>

<pallas_src>
import jax
import jax.numpy as jnp
from jax.experimental import pallas as pl
from jax.experimental.pallas import tpu as pltpu

IN_F = 28 * 28      # 784 = 49*16: packs exactly into bf16 sublane tiles, div by 8
H4_PAD = 128        # fc4 output / fc5 input padded 64 -> 128 (lane-dense)
OUT_F = 10
OUT_PAD = 128       # lane-dense logits store

TB_MAX = 1024       # biggest tile still well inside VMEM on every generation
MIN_SPLIT_ROWS = 256  # below this, splitting the grid just adds per-step overhead


def _round_up(n, m):
    return ((n + m - 1) // m) * m


def _cdiv(a, b):
    return (a + b - 1) // b


def _mlp_kernel(x_ref,
                w1_ref, b1_ref,
                w2_ref, b2_ref,
                w3_ref, b3_ref,
                w4_ref, b4_ref,
                w5_ref, b5_ref,
                o_ref):
    """Fused 5-layer MLP forward on one (TB, 784) batch tile.

    f32 activations are cast to bf16 in-kernel; bf16 weights, f32 MXU
    accumulation, f32 bias add + ReLU, re-cast to bf16 between layers.
    Final layer writes f32 logits padded to 128 lanes.
    """
    h = x_ref[...].astype(jnp.bfloat16)                                   # (TB, 784)

    h = jnp.dot(h, w1_ref[...], preferred_element_type=jnp.float32) + b1_ref[...]
    h = jnp.maximum(h, 0.0).astype(jnp.bfloat16)                          # (TB, 512)
    # dropout(p=0.3) -> identity (eval mode)
    # TODO(synk): training-mode dropout (pltpu.prng_random_bits masking) not implemented.

    h = jnp.dot(h, w2_ref[...], preferred_element_type=jnp.float32) + b2_ref[...]
    h = jnp.maximum(h, 0.0).astype(jnp.bfloat16)                          # (TB, 256)

    h = jnp.dot(h, w3_ref[...], preferred_element_type=jnp.float32) + b3_ref[...]
    h = jnp.maximum(h, 0.0).astype(jnp.bfloat16)                          # (TB, 128)

    h = jnp.dot(h, w4_ref[...], preferred_element_type=jnp.float32) + b4_ref[...]
    h = jnp.maximum(h, 0.0).astype(jnp.bfloat16)                          # (TB, 128) lane-dense

    o_ref[...] = jnp.dot(h, w5_ref[...], preferred_element_type=jnp.float32) + b5_ref[...]


def deep_nn_forward(x, params):
    """x: (B, 1, 28, 28) (NCHW) or anything whose trailing dims flatten to 784."""
    (w1, b1), (w2, b2), (w3, b3), (w4, b4), (w5, b5) = params

    x2d = x.reshape(-1, IN_F).astype(jnp.float32)   # (B, 784); no feature padding
    B = x2d.shape[0]

    # Adaptive batch tiling (see header for rationale).
    num_tiles = _cdiv(B, TB_MAX)
    if B >= MIN_SPLIT_ROWS:
        num_tiles = _round_up(num_tiles, 2)         # v7x: feed both TensorCores
    TB = _round_up(_cdiv(B, num_tiles), 8)          # sublane-aligned
    B_pad = TB * num_tiles
    if B_pad != B:
        x2d = jnp.pad(x2d, ((0, B_pad - B), (0, 0)))

    # Weights -> bf16 (halves weight HBM traffic, native bf16 MXU path).
    w1b = w1.astype(jnp.bfloat16)                                          # (784, 512)
    w2b = w2.astype(jnp.bfloat16)                                          # (512, 256)
    w3b = w3.astype(jnp.bfloat16)                                          # (256, 128)
    # Pad fc4 output / fc5 input 64 -> 128 with zeros (relu(0)=0, zero rows of
    # w5 contribute nothing), and fc5 output 10 -> 128 lanes.
    w4p = jnp.pad(w4, ((0, 0), (0, H4_PAD - w4.shape[1]))).astype(jnp.bfloat16)   # (128, 128)
    b4p = jnp.pad(b4, ((0, 0), (0, H4_PAD - b4.shape[1])))                        # (1, 128)
    w5p = jnp.pad(w5, ((0, H4_PAD - w5.shape[0]),
                       (0, OUT_PAD - OUT_F))).astype(jnp.bfloat16)                # (128, 128)
    b5p = jnp.pad(b5, ((0, 0), (0, OUT_PAD - OUT_F)))                             # (1, 128)

    grid = (num_tiles,)

    def resident(arr):
        # Constant index_map => same block every grid step => weights/biases are
        # DMA'd once and stay resident in VMEM across grid iterations.
        return pl.BlockSpec(arr.shape, lambda i: (0, 0))

    out = pl.pallas_call(
        _mlp_kernel,
        out_shape=jax.ShapeDtypeStruct((B_pad, OUT_PAD), jnp.float32),
        grid=grid,
        in_specs=[
            pl.BlockSpec((TB, IN_F), lambda i: (i, 0)),   # streamed f32 activations
            resident(w1b), resident(b1),
            resident(w2b), resident(b2),
            resident(w3b), resident(b3),
            resident(w4p), resident(b4p),
            resident(w5p), resident(b5p),
        ],
        out_specs=pl.BlockSpec((TB, OUT_PAD), lambda i: (i, 0)),
        compiler_params=pltpu.CompilerParams(
            dimension_semantics=("parallel",),
            vmem_limit_bytes=32 * 1024 * 1024,   # headroom on v5e; default elsewhere
        ),
    )(x2d, w1b, b1, w2b, b2, w3b, b3, w4p, b4p, w5p, b5p)

    return out[:B, :OUT_F]


def init_params(key):
    """Deterministic init mimicking nn.Linear (uniform(-1/sqrt(fan_in), 1/sqrt(fan_in))).

    Weights stored as (in_features, out_features) — the transpose of PyTorch's
    layout — so the kernel computes x @ W directly. Biases stored as
    (1, out_features) f32 for lane-wise broadcast.
    """
    dims = [(IN_F, 512), (512, 256), (256, 128), (128, 64), (64, OUT_F)]
    params = []
    for i, (fan_in, fan_out) in enumerate(dims):
        kw, kb = jax.random.split(jax.random.fold_in(key, i))
        bound = 1.0 / (fan_in ** 0.5)
        w = jax.random.uniform(kw, (fan_in, fan_out), jnp.float32, -bound, bound)
        b = jax.random.uniform(kb, (1, fan_out), jnp.float32, -bound, bound)
        params.append((w, b))
    return params


def _reference_forward(x, params):
    """Pure-JAX f32 reference (eval-mode dropout = identity)."""
    h = x.reshape(-1, IN_F).astype(jnp.float32)
    for i, (w, b) in enumerate(params):
        h = h @ w + b
        if i < len(params) - 1:
            h = jnp.maximum(h, 0.0)
    return h


if __name__ == "__main__":
    key = jax.random.PRNGKey(0)
    k_x, k_p = jax.random.split(key)

    # Small MNIST-like batch: (B=2, C=1, H=28, W=28), NCHW as in PyTorch.
    x = jax.random.normal(k_x, (2, 1, 28, 28), dtype=jnp.float32)
    params = init_params(k_p)

    out = deep_nn_forward(x, params)
    out = jax.block_until_ready(out)

    assert out.shape == (2, 10), out.shape
    assert out.dtype == jnp.float32, out.dtype
    assert bool(jnp.all(jnp.isfinite(out)))

    # Loose tolerance: kernel runs bf16 weights/activations with f32 accumulation.
    ref = _reference_forward(x, params)
    assert bool(jnp.max(jnp.abs(out - ref)) < 0.1), float(jnp.max(jnp.abs(out - ref)))

    print("KERNEL_OK")
</pallas_src>

<mosaic_0001>
module attributes {stable_mosaic.version = 11 : i64} {
  func.func @_mlp_kernel(%arg0: i32, %arg1: memref<8x784xf32, #tpu.memory_space<vmem>>, %arg2: memref<784x512xbf16, #tpu.memory_space<vmem>>, %arg3: memref<1x512xf32, #tpu.memory_space<vmem>>, %arg4: memref<512x256xbf16, #tpu.memory_space<vmem>>, %arg5: memref<1x256xf32, #tpu.memory_space<vmem>>, %arg6: memref<256x128xbf16, #tpu.memory_space<vmem>>, %arg7: memref<1x128xf32, #tpu.memory_space<vmem>>, %arg8: memref<128x128xbf16, #tpu.memory_space<vmem>>, %arg9: memref<1x128xf32, #tpu.memory_space<vmem>>, %arg10: memref<128x128xbf16, #tpu.memory_space<vmem>>, %arg11: memref<1x128xf32, #tpu.memory_space<vmem>>, %arg12: memref<8x128xf32, #tpu.memory_space<vmem>>) attributes {dimension_semantics = [#tpu.dimension_semantics<parallel>], iteration_bounds = array<i64: 1>, scalar_prefetch = 0 : i64, scratch_operands = 0 : i64, tpu.core_type = #tpu.core_type<tc>, window_params = [{transform_indices = @transform_0, window_bounds = array<i64: 8, 784>}, {pipeline_mode = #tpu.pipeline_mode<synchronous>, transform_indices = @transform_1, window_bounds = array<i64: 784, 512>}, {pipeline_mode = #tpu.pipeline_mode<synchronous>, transform_indices = @transform_2, window_bounds = array<i64: 1, 512>}, {pipeline_mode = #tpu.pipeline_mode<synchronous>, transform_indices = @transform_3, window_bounds = array<i64: 512, 256>}, {pipeline_mode = #tpu.pipeline_mode<synchronous>, transform_indices = @transform_4, window_bounds = array<i64: 1, 256>}, {pipeline_mode = #tpu.pipeline_mode<synchronous>, transform_indices = @transform_5, window_bounds = array<i64: 256, 128>}, {pipeline_mode = #tpu.pipeline_mode<synchronous>, transform_indices = @transform_6, window_bounds = array<i64: 1, 128>}, {pipeline_mode = #tpu.pipeline_mode<synchronous>, transform_indices = @transform_7, window_bounds = array<i64: 128, 128>}, {pipeline_mode = #tpu.pipeline_mode<synchronous>, transform_indices = @transform_8, window_bounds = array<i64: 1, 128>}, {pipeline_mode = #tpu.pipeline_mode<synchronous>, transform_indices = @transform_9, window_bounds = array<i64: 128, 128>}, {pipeline_mode = #tpu.pipeline_mode<synchronous>, transform_indices = @transform_10, window_bounds = array<i64: 1, 128>}, {transform_indices = @transform_11, window_bounds = array<i64: 8, 128>}]} {
    %c0 = arith.constant 0 : index
    %c0_0 = arith.constant 0 : index
    %0 = vector.load %arg1[%c0, %c0_0] : memref<8x784xf32, #tpu.memory_space<vmem>>, vector<8x784xf32>
    %1 = arith.truncf %0 : vector<8x784xf32> to vector<8x784xbf16>
    %c0_1 = arith.constant 0 : index
    %c0_2 = arith.constant 0 : index
    %2 = vector.load %arg2[%c0_1, %c0_2] : memref<784x512xbf16, #tpu.memory_space<vmem>>, vector<784x512xbf16>
    %cst = arith.constant dense<0.000000e+00> : vector<8x512xf32>
    %3 = tpu.matmul %1, %2, %cst {dimension_numbers = #tpu.dot_dimension_numbers<[1], [0], [0], [1], [0, 0, 1, 1], [], []>} : vector<8x784xbf16>, vector<784x512xbf16>, vector<8x512xf32> -> vector<8x512xf32>
    %c0_3 = arith.constant 0 : index
    %c0_4 = arith.constant 0 : index
    %4 = vector.load %arg3[%c0_3, %c0_4] : memref<1x512xf32, #tpu.memory_space<vmem>>, vector<1x512xf32>
    %5 = vector.broadcast %4 : vector<1x512xf32> to vector<8x512xf32>
    %6 = arith.addf %3, %5 : vector<8x512xf32>
    %cst_5 = arith.constant 0.000000e+00 : f32
    %7 = vector.broadcast %cst_5 : f32 to vector<8x512xf32>
    %8 = arith.maximumf %6, %7 : vector<8x512xf32>
    %9 = arith.truncf %8 : vector<8x512xf32> to vector<8x512xbf16>
    %c0_6 = arith.constant 0 : index
    %c0_7 = arith.constant 0 : index
    %10 = vector.load %arg4[%c0_6, %c0_7] : memref<512x256xbf16, #tpu.memory_space<vmem>>, vector<512x256xbf16>
    %cst_8 = arith.constant dense<0.000000e+00> : vector<8x256xf32>
    %11 = tpu.matmul %9, %10, %cst_8 {dimension_numbers = #tpu.dot_dimension_numbers<[1], [0], [0], [1], [0, 0, 1, 1], [], []>} : vector<8x512xbf16>, vector<512x256xbf16>, vector<8x256xf32> -> vector<8x256xf32>
    %c0_9 = arith.constant 0 : index
    %c0_10 = arith.constant 0 : index
    %12 = vector.load %arg5[%c0_9, %c0_10] : memref<1x256xf32, #tpu.memory_space<vmem>>, vector<1x256xf32>
    %13 = vector.broadcast %12 : vector<1x256xf32> to vector<8x256xf32>
    %14 = arith.addf %11, %13 : vector<8x256xf32>
    %cst_11 = arith.constant 0.000000e+00 : f32
    %15 = vector.broadcast %cst_11 : f32 to vector<8x256xf32>
    %16 = arith.maximumf %14, %15 : vector<8x256xf32>
    %17 = arith.truncf %16 : vector<8x256xf32> to vector<8x256xbf16>
    %c0_12 = arith.constant 0 : index
    %c0_13 = arith.constant 0 : index
    %18 = vector.load %arg6[%c0_12, %c0_13] : memref<256x128xbf16, #tpu.memory_space<vmem>>, vector<256x128xbf16>
    %cst_14 = arith.constant dense<0.000000e+00> : vector<8x128xf32>
    %19 = tpu.matmul %17, %18, %cst_14 {dimension_numbers = #tpu.dot_dimension_numbers<[1], [0], [0], [1], [0, 0, 1, 1], [], []>} : vector<8x256xbf16>, vector<256x128xbf16>, vector<8x128xf32> -> vector<8x128xf32>
    %c0_15 = arith.constant 0 : index
    %c0_16 = arith.constant 0 : index
    %20 = vector.load %arg7[%c0_15, %c0_16] : memref<1x128xf32, #tpu.memory_space<vmem>>, vector<1x128xf32>
    %21 = vector.broadcast %20 : vector<1x128xf32> to vector<8x128xf32>
    %22 = arith.addf %19, %21 : vector<8x128xf32>
    %cst_17 = arith.constant 0.000000e+00 : f32
    %23 = vector.broadcast %cst_17 : f32 to vector<8x128xf32>
    %24 = arith.maximumf %22, %23 : vector<8x128xf32>
    %25 = arith.truncf %24 : vector<8x128xf32> to vector<8x128xbf16>
    %c0_18 = arith.constant 0 : index
    %c0_19 = arith.constant 0 : index
    %26 = vector.load %arg8[%c0_18, %c0_19] : memref<128x128xbf16, #tpu.memory_space<vmem>>, vector<128x128xbf16>
    %cst_20 = arith.constant dense<0.000000e+00> : vector<8x128xf32>
    %27 = tpu.matmul %25, %26, %cst_20 {dimension_numbers = #tpu.dot_dimension_numbers<[1], [0], [0], [1], [0, 0, 1, 1], [], []>} : vector<8x128xbf16>, vector<128x128xbf16>, vector<8x128xf32> -> vector<8x128xf32>
    %c0_21 = arith.constant 0 : index
    %c0_22 = arith.constant 0 : index
    %28 = vector.load %arg9[%c0_21, %c0_22] : memref<1x128xf32, #tpu.memory_space<vmem>>, vector<1x128xf32>
    %29 = vector.broadcast %28 : vector<1x128xf32> to vector<8x128xf32>
    %30 = arith.addf %27, %29 : vector<8x128xf32>
    %cst_23 = arith.constant 0.000000e+00 : f32
    %31 = vector.broadcast %cst_23 : f32 to vector<8x128xf32>
    %32 = arith.maximumf %30, %31 : vector<8x128xf32>
    %33 = arith.truncf %32 : vector<8x128xf32> to vector<8x128xbf16>
    %c0_24 = arith.constant 0 : index
    %c0_25 = arith.constant 0 : index
    %34 = vector.load %arg10[%c0_24, %c0_25] : memref<128x128xbf16, #tpu.memory_space<vmem>>, vector<128x128xbf16>
    %cst_26 = arith.constant dense<0.000000e+00> : vector<8x128xf32>
    %35 = tpu.matmul %33, %34, %cst_26 {dimension_numbers = #tpu.dot_dimension_numbers<[1], [0], [0], [1], [0, 0, 1, 1], [], []>} : vector<8x128xbf16>, vector<128x128xbf16>, vector<8x128xf32> -> vector<8x128xf32>
    %c0_27 = arith.constant 0 : index
    %c0_28 = arith.constant 0 : index
    %36 = vector.load %arg11[%c0_27, %c0_28] : memref<1x128xf32, #tpu.memory_space<vmem>>, vector<1x128xf32>
    %37 = vector.broadcast %36 : vector<1x128xf32> to vector<8x128xf32>
    %38 = arith.addf %35, %37 : vector<8x128xf32>
    %c0_29 = arith.constant 0 : index
    %c0_30 = arith.constant 0 : index
    %39 = vector.load %arg12[%c0_29, %c0_30] : memref<8x128xf32, #tpu.memory_space<vmem>>, vector<8x128xf32>
    tpu.vector_store %arg12[%c0_29, %c0_30], %38 {strides = array<i32>} : memref<8x128xf32, #tpu.memory_space<vmem>>, vector<8x128xf32>,
    return
  }
  func.func @transform_0(%arg0: i32) -> (i32, i32) {
    %c0_i32 = arith.constant 0 : i32
    %c0_i32_0 = arith.constant 0 : i32
    return %arg0, %c0_i32 : i32, i32
  }
  func.func @transform_1(%arg0: i32) -> (i32, i32) {
    %c0_i32 = arith.constant 0 : i32
    %c0_i32_0 = arith.constant 0 : i32
    %c0_i32_1 = arith.constant 0 : i32
    return %c0_i32, %c0_i32_0 : i32, i32
  }
  func.func @transform_2(%arg0: i32) -> (i32, i32) {
    %c0_i32 = arith.constant 0 : i32
    %c0_i32_0 = arith.constant 0 : i32
    %c0_i32_1 = arith.constant 0 : i32
    return %c0_i32, %c0_i32_0 : i32, i32
  }
  func.func @transform_3(%arg0: i32) -> (i32, i32) {
    %c0_i32 = arith.constant 0 : i32
    %c0_i32_0 = arith.constant 0 : i32
    %c0_i32_1 = arith.constant 0 : i32
    return %c0_i32, %c0_i32_0 : i32, i32
  }
  func.func @transform_4(%arg0: i32) -> (i32, i32) {
    %c0_i32 = arith.constant 0 : i32
    %c0_i32_0 = arith.constant 0 : i32
    %c0_i32_1 = arith.constant 0 : i32
    return %c0_i32, %c0_i32_0 : i32, i32
  }
  func.func @transform_5(%arg0: i32) -> (i32, i32) {
    %c0_i32 = arith.constant 0 : i32
    %c0_i32_0 = arith.constant 0 : i32
    %c0_i32_1 = arith.constant 0 : i32
    return %c0_i32, %c0_i32_0 : i32, i32
  }
  func.func @transform_6(%arg0: i32) -> (i32, i32) {
    %c0_i32 = arith.constant 0 : i32
    %c0_i32_0 = arith.constant 0 : i32
    %c0_i32_1 = arith.constant 0 : i32
    return %c0_i32, %c0_i32_0 : i32, i32
  }
  func.func @transform_7(%arg0: i32) -> (i32, i32) {
    %c0_i32 = arith.constant 0 : i32
    %c0_i32_0 = arith.constant 0 : i32
    %c0_i32_1 = arith.constant 0 : i32
    return %c0_i32, %c0_i32_0 : i32, i32
  }
  func.func @transform_8(%arg0: i32) -> (i32, i32) {
    %c0_i32 = arith.constant 0 : i32
    %c0_i32_0 = arith.constant 0 : i32
    %c0_i32_1 = arith.constant 0 : i32
    return %c0_i32, %c0_i32_0 : i32, i32
  }
  func.func @transform_9(%arg0: i32) -> (i32, i32) {
    %c0_i32 = arith.constant 0 : i32
    %c0_i32_0 = arith.constant 0 : i32
    %c0_i32_1 = arith.constant 0 : i32
    return %c0_i32, %c0_i32_0 : i32, i32
  }
  func.func @transform_10(%arg0: i32) -> (i32, i32) {
    %c0_i32 = arith.constant 0 : i32
    %c0_i32_0 = arith.constant 0 : i32
    %c0_i32_1 = arith.constant 0 : i32
    return %c0_i32, %c0_i32_0 : i32, i32
  }
  func.func @transform_11(%arg0: i32) -> (i32, i32) {
    %c0_i32 = arith.constant 0 : i32
    %c0_i32_0 = arith.constant 0 : i32
    return %arg0, %c0_i32 : i32, i32
  }
}

</mosaic_0001>

<llo_original>
// kernel: tpu_custom_call.1
$region0: #{tpu_custom_call.1}
  #allocation0 [shape = 'u32[]', space=smem, size = 0x4, offset = 0x4, fixed_abs, tag = 'smem constant byte address 0x4 - core index']
  #allocation1 [shape = 'u32[72,128]{1,0:T(1,128)}', space=vmem, size = 0x9000, scoped, tag = 'internal scratch']
  %s0 = inlined_call_operand.hbm [shape: f32[8,784], index: 0, kind: input, shape index: {}]
  %s1 = inlined_call_operand.hbm [shape: bf16[784,512], index: 1, kind: input, shape index: {}]
  %s2 = inlined_call_operand.hbm [shape: f32[1,512], index: 2, kind: input, shape index: {}]
  %s3 = inlined_call_operand.hbm [shape: bf16[512,256], index: 3, kind: input, shape index: {}]
  %s4 = inlined_call_operand.vmem [shape: f32[1,256], index: 4, kind: input, shape index: {}]
  %s5 = inlined_call_operand.hbm [shape: bf16[256,128], index: 5, kind: input, shape index: {}]
  %s6 = inlined_call_operand.vmem [shape: f32[1,128], index: 6, kind: input, shape index: {}]
  %s7 = inlined_call_operand.hbm [shape: bf16[128,128], index: 7, kind: input, shape index: {}]
  %s8 = inlined_call_operand.vmem [shape: f32[1,128], index: 8, kind: input, shape index: {}]
  %s9 = inlined_call_operand.hbm [shape: bf16[128,128], index: 9, kind: input, shape index: {}]
  %s10 = inlined_call_operand.vmem [shape: f32[1,128], index: 10, kind: input, shape index: {}]
  %s11 = inlined_call_operand.hbm [shape: f32[8,128], index: 11, kind: output, shape index: {}]
  %s12 = sld [smem:[#allocation0]]
  $region82: #{tpu_custom_call.1} parent=0
    _
  %s14 = ssub.s32 1, %s12
  %s15 = scalar_select 0, %s14, %s12
  $region1: #{tpu_custom_call.1} parent=0
    #allocation2 [shape = 'u8[28672]{0}', space=vmem, size = 0x7000, scoped, tag = 'input window, operand 0, single buffered']
    #allocation3 [shape = 's32[1]{0}', space=sflag, size = 0x4, scoped, tag = 'scoped memory for tpu_custom_call.1']
    #allocation4 [shape = 's32[1]{0}', space=sflag, size = 0x4, scoped, tag = 'scoped memory for tpu_custom_call.1']
    #allocation5 [shape = 'u8[802816]{0}', space=vmem, size = 0xc4000, scoped, tag = 'input window, operand 1, single buffered']
    #allocation6 [shape = 's32[1]{0}', space=sflag, size = 0x4, scoped, tag = 'scoped memory for tpu_custom_call.1']
    #allocation7 [shape = 'u8[2048]{0}', space=vmem, size = 0x800, scoped, tag = 'input window, operand 2, single buffered']
    #allocation8 [shape = 'u8[262144]{0}', space=vmem, size = 0x40000, scoped, tag = 'input window, operand 3, single buffered']
    #allocation9 [shape = 's32[1]{0}', space=sflag, size = 0x4, scoped, tag = 'scoped memory for tpu_custom_call.1']
    #allocation10 [shape = 'u8[65536]{0}', space=vmem, size = 0x10000, scoped, tag = 'input window, operand 5, single buffered']
    #allocation11 [shape = 'u8[32768]{0}', space=vmem, size = 0x8000, scoped, tag = 'input window, operand 7, single buffered']
    #allocation12 [shape = 's32[1]{0}', space=sflag, size = 0x4, scoped, tag = 'scoped memory for tpu_custom_call.1']
    #allocation13 [shape = 'u8[32768]{0}', space=vmem, size = 0x8000, scoped, tag = 'input window, operand 9, single buffered']
    #allocation14 [shape = 'u8[4096]{0}', space=vmem, size = 0x1000, scoped, tag = 'output window, operand 0, single buffered']
    %16 = vsyncpa [#allocation3], 0
    %17 = vsyncpa [#allocation6], 0
    %18 = vsyncpa [#allocation9], 0
    %19 = vsyncpa [#allocation12], 0
    %20 = vsyncpa [#allocation4], 0
    // Predicated region
    $region2: #{tpu_custom_call.1} parent=1 // pred_check
      _
    $region3: #{tpu_custom_call.1} parent=1 // pred_check_branch
      %22 = sbr.rel (0) target = $region5
    $region4: #{tpu_custom_call.1} parent=1 // pred_region
      %24 = vsyncadd [#allocation3], 0
      %s26 = sshll.u32 %s0, 4
      %s27 = int_to_ptr.hbm [resolvable:$true] %s26
      %s28 = sshll.u32 [#allocation2], 4
      %s29 = int_to_ptr.vmem [resolvable:$true] %s28
      %31 = dma.hbm_to_vmem [thread:$0]  %s27, 896, %s29, [#allocation3]
    $region5: #{tpu_custom_call.1} parent=1 // pred_fallthru
      _
    // Predicated region
    $region6: #{tpu_custom_call.1} parent=1 // pred_check
      _
    $region7: #{tpu_custom_call.1} parent=1 // pred_check_branch
      %33 = sbr.rel (0) target = $region9
    $region8: #{tpu_custom_call.1} parent=1 // pred_region
      %35 = vsyncadd [#allocation6], 0
      %s36 = sshll.u32 %s1, 4
      %s37 = int_to_ptr.hbm [resolvable:$true] %s36
      %s38 = sshll.u32 [#allocation5], 4
      %s39 = int_to_ptr.vmem [resolvable:$true] %s38
      %44 = dma.hbm_to_vmem [thread:$0]  %s37, 25088, %s39, [#allocation6], 256, 256, 16
    $region9: #{tpu_custom_call.1} parent=1 // pred_fallthru
      _
    // Predicated region
    $region10: #{tpu_custom_call.1} parent=1 // pred_check
      _
    $region11: #{tpu_custom_call.1} parent=1 // pred_check_branch
      %46 = sbr.rel (0) target = $region13
    $region12: #{tpu_custom_call.1} parent=1 // pred_region
      %48 = vsyncadd [#allocation6], 0
      %s50 = sshll.u32 %s2, 4
      %s51 = int_to_ptr.hbm [resolvable:$true] %s50
      %s52 = sshll.u32 [#allocation7], 4
      %s53 = int_to_ptr.vmem [resolvable:$true] %s52
      %55 = dma.hbm_to_vmem [thread:$0]  %s51, 64, %s53, [#allocation6]
    $region13: #{tpu_custom_call.1} parent=1 // pred_fallthru
      _
    // Predicated region
    $region14: #{tpu_custom_call.1} parent=1 // pred_check
      _
    $region15: #{tpu_custom_call.1} parent=1 // pred_check_branch
      %57 = sbr.rel (0) target = $region17
    $region16: #{tpu_custom_call.1} parent=1 // pred_region
      %59 = vsyncadd [#allocation9], 0
      %s60 = sshll.u32 %s3, 4
      %s61 = int_to_ptr.hbm [resolvable:$true] %s60
      %s62 = sshll.u32 [#allocation8], 4
      %s63 = int_to_ptr.vmem [resolvable:$true] %s62
      %68 = dma.hbm_to_vmem [thread:$0]  %s61, 8192, %s63, [#allocation9], 128, 128, 8
    $region17: #{tpu_custom_call.1} parent=1 // pred_fallthru
      _
    // Predicated region
    $region18: #{tpu_custom_call.1} parent=1 // pred_check
      _
    $region19: #{tpu_custom_call.1} parent=1 // pred_check_branch
      %70 = sbr.rel (0) target = $region21
    $region20: #{tpu_custom_call.1} parent=1 // pred_region
      _
    $region21: #{tpu_custom_call.1} parent=1 // pred_fallthru
      _
    // Predicated region
    $region22: #{tpu_custom_call.1} parent=1 // pred_check
      _
    $region23: #{tpu_custom_call.1} parent=1 // pred_check_branch
      %72 = sbr.rel (0) target = $region25
    $region24: #{tpu_custom_call.1} parent=1 // pred_region
      %74 = vsyncadd [#allocation9], 0
      %s75 = sshll.u32 %s5, 4
      %s76 = int_to_ptr.hbm [resolvable:$true] %s75
      %s77 = sshll.u32 [#allocation10], 4
      %s78 = int_to_ptr.vmem [resolvable:$true] %s77
      %83 = dma.hbm_to_vmem [thread:$0]  %s76, 2048, %s78, [#allocation9], 64, 64, 4
    $region25: #{tpu_custom_call.1} parent=1 // pred_fallthru
      _
    // Predicated region
    $region26: #{tpu_custom_call.1} parent=1 // pred_check
      _
    $region27: #{tpu_custom_call.1} parent=1 // pred_check_branch
      %85 = sbr.rel (0) target = $region29
    $region28: #{tpu_custom_call.1} parent=1 // pred_region
      _
    $region29: #{tpu_custom_call.1} parent=1 // pred_fallthru
      _
    // Predicated region
    $region30: #{tpu_custom_call.1} parent=1 // pred_check
      _
    $region31: #{tpu_custom_call.1} parent=1 // pred_check_branch
      %87 = sbr.rel (0) target = $region33
    $region32: #{tpu_custom_call.1} parent=1 // pred_region
      %89 = vsyncadd [#allocation12], 0
      %s90 = sshll.u32 %s7, 4
      %s91 = int_to_ptr.hbm [resolvable:$true] %s90
      %s92 = sshll.u32 [#allocation11], 4
      %s93 = int_to_ptr.vmem [resolvable:$true] %s92
      %98 = dma.hbm_to_vmem [thread:$0]  %s91, 1024, %s93, [#allocation12], 64, 64, 4
    $region33: #{tpu_custom_call.1} parent=1 // pred_fallthru
      _
    // Predicated region
    $region34: #{tpu_custom_call.1} parent=1 // pred_check
      _
    $region35: #{tpu_custom_call.1} parent=1 // pred_check_branch
      %100 = sbr.rel (0) target = $region37
    $region36: #{tpu_custom_call.1} parent=1 // pred_region
      _
    $region37: #{tpu_custom_call.1} parent=1 // pred_fallthru
      _
    // Predicated region
    $region38: #{tpu_custom_call.1} parent=1 // pred_check
      _
    $region39: #{tpu_custom_call.1} parent=1 // pred_check_branch
      %102 = sbr.rel (0) target = $region41
    $region40: #{tpu_custom_call.1} parent=1 // pred_region
      %104 = vsyncadd [#allocation12], 0
      %s105 = sshll.u32 %s9, 4
      %s106 = int_to_ptr.hbm [resolvable:$true] %s105
      %s107 = sshll.u32 [#allocation13], 4
      %s108 = int_to_ptr.vmem [resolvable:$true] %s107
      %113 = dma.hbm_to_vmem [thread:$0]  %s106, 1024, %s108, [#allocation12], 64, 64, 4
    $region41: #{tpu_custom_call.1} parent=1 // pred_fallthru
      _
    // Predicated region
    $region42: #{tpu_custom_call.1} parent=1 // pred_check
      _
    $region43: #{tpu_custom_call.1} parent=1 // pred_check_branch
      %115 = sbr.rel (0) target = $region45
    $region44: #{tpu_custom_call.1} parent=1 // pred_region
      _
    $region45: #{tpu_custom_call.1} parent=1 // pred_fallthru
      _
    // Predicated region
    $region46: #{tpu_custom_call.1} parent=1 // pred_check
      _
    $region47: #{tpu_custom_call.1} parent=1 // pred_check_branch
      %117 = sbr.rel (0) target = $region49
    $region48: #{tpu_custom_call.1} parent=1 // pred_region
      %119 = dma.done [#allocation3], 896
    $region49: #{tpu_custom_call.1} parent=1 // pred_fallthru
      _
    // Predicated region
    $region50: #{tpu_custom_call.1} parent=1 // pred_check
      _
    $region51: #{tpu_custom_call.1} parent=1 // pred_check_branch
      %121 = sbr.rel (0) target = $region53
    $region52: #{tpu_custom_call.1} parent=1 // pred_region
      %123 = dma.done [#allocation6], 25088
    $region53: #{tpu_custom_call.1} parent=1 // pred_fallthru
      _
    // Predicated region
    $region54: #{tpu_custom_call.1} parent=1 // pred_check
      _
    $region55: #{tpu_custom_call.1} parent=1 // pred_check_branch
      %125 = sbr.rel (0) target = $region57
    $region56: #{tpu_custom_call.1} parent=1 // pred_region
      %127 = dma.done [#allocation6], 64
    $region57: #{tpu_custom_call.1} parent=1 // pred_fallthru
      _
    // Predicated region
    $region58: #{tpu_custom_call.1} parent=1 // pred_check
      _
    $region59: #{tpu_custom_call.1} parent=1 // pred_check_branch
      %129 = sbr.rel (0) target = $region61
    $region60: #{tpu_custom_call.1} parent=1 // pred_region
      %131 = dma.done [#allocation9], 8192
    $region61: #{tpu_custom_call.1} parent=1 // pred_fallthru
      _
    // Predicated region
    $region62: #{tpu_custom_call.1} parent=1 // pred_check
      _
    $region63: #{tpu_custom_call.1} parent=1 // pred_check_branch
      %133 = sbr.rel (0) target = $region65
    $region64: #{tpu_custom_call.1} parent=1 // pred_region
      %135 = dma.done [#allocation9], 2048
    $region65: #{tpu_custom_call.1} parent=1 // pred_fallthru
      _
    // Predicated region
    $region66: #{tpu_custom_call.1} parent=1 // pred_check
      _
    $region67: #{tpu_custom_call.1} parent=1 // pred_check_branch
      %137 = sbr.rel (0) target = $region69
    $region68: #{tpu_custom_call.1} parent=1 // pred_region
      %139 = dma.done [#allocation12], 1024
    $region69: #{tpu_custom_call.1} parent=1 // pred_fallthru
      _
    // Predicated region
    $region70: #{tpu_custom_call.1} parent=1 // pred_check
      _
    $region71: #{tpu_custom_call.1} parent=1 // pred_check_branch
      %141 = sbr.rel (0) target = $region73
    $region72: #{tpu_custom_call.1} parent=1 // pred_region
      %143 = dma.done [#allocation12], 1024
    $region73: #{tpu_custom_call.1} parent=1 // pred_fallthru
      _
    %v145 = vld [vmem:[#allocation2] sm:$0xff]
    %v146 = vld [vmem:[#allocation2 + $0x8] sm:$0xff]
    %v147 = vld [vmem:[#allocation2 + $0x10] sm:$0xff]
    %v148 = vld [vmem:[#allocation2 + $0x18] sm:$0xff]
    %v149 = vld [vmem:[#allocation2 + $0x20] sm:$0xff]
    %v150 = vld [vmem:[#allocation2 + $0x28] sm:$0xff]
    %v151 = vld [vmem:[#allocation2 + $0x30] sm:$0xff]
    %v152 = vpack.c.bf16 %v145, %v145
    %v153 = vpack.c.bf16 %v146, %v146
    %v154 = vpack.c.bf16 %v147, %v147
    %v155 = vpack.c.bf16 %v148, %v148
    %v156 = vpack.c.bf16 %v149, %v149
    %v157 = vpack.c.bf16 %v150, %v150
    %v158 = vpack.c.bf16 %v151, %v151
    %v159 = vld [vmem:[#allocation5] sm:$0xff]
    %v160 = vld [vmem:[#allocation5 + $0x8] sm:$0xff]
    %v161 = vld [vmem:[#allocation5 + $0x10] sm:$0xff]
    %v162 = vld [vmem:[#allocation5 + $0x18] sm:$0xff]
    %v163 = vld [vmem:[#allocation5 + $0x20] sm:$0xff]
    %v164 = vld [vmem:[#allocation5 + $0x28] sm:$0xff]
    %v165 = vld [vmem:[#allocation5 + $0x30] sm:$0xff]
    %v166 = vld [vmem:[#allocation5 + $0x38] sm:$0xff]
    %v167 = vld [vmem:[#allocation5 + $0x40] sm:$0xff]
    %v168 = vld [vmem:[#allocation5 + $0x48] sm:$0xff]
    %v169 = vld [vmem:[#allocation5 + $0x50] sm:$0xff]
    %v170 = vld [vmem:[#allocation5 + $0x58] sm:$0xff]
    %v171 = vld [vmem:[#allocation5 + $0x60] sm:$0xff]
    %v172 = vld [vmem:[#allocation5 + $0x68] sm:$0xff]
    %v173 = vld [vmem:[#allocation5 + $0x70] sm:$0xff]
    %v174 = vld [vmem:[#allocation5 + $0x78] sm:$0xff]
    %v175 = vld [vmem:[#allocation5 + $0x80] sm:$0xff]
    %v176 = vld [vmem:[#allocation5 + $0x88] sm:$0xff]
    %v177 = vld [vmem:[#allocation5 + $0x90] sm:$0xff]
    %v178 = vld [vmem:[#allocation5 + $0x98] sm:$0xff]
    %v179 = vld [vmem:[#allocation5 + $0xa0] sm:$0xff]
    %v180 = vld [vmem:[#allocation5 + $0xa8] sm:$0xff]
    %v181 = vld [vmem:[#allocation5 + $0xb0] sm:$0xff]
    %v182 = vld [vmem:[#allocation5 + $0xb8] sm:$0xff]
    %v183 = vld [vmem:[#allocation5 + $0xc0] sm:$0xff]
    %v184 = vld [vmem:[#allocation5 + $0xc8] sm:$0xff]
    %v185 = vld [vmem:[#allocation5 + $0xd0] sm:$0xff]
    %v186 = vld [vmem:[#allocation5 + $0xd8] sm:$0xff]
    %v187 = vld [vmem:[#allocation5 + $0xe0] sm:$0xff]
    %v188 = vld [vmem:[#allocation5 + $0xe8] sm:$0xff]
    %v189 = vld [vmem:[#allocation5 + $0xf0] sm:$0xff]
    %v190 = vld [vmem:[#allocation5 + $0xf8] sm:$0xff]
    %v191 = vld [vmem:[#allocation5 + $0x100] sm:$0xff]
    %v192 = vld [vmem:[#allocation5 + $0x108] sm:$0xff]
    %v193 = vld [vmem:[#allocation5 + $0x110] sm:$0xff]
    %v194 = vld [vmem:[#allocation5 + $0x118] sm:$0xff]
    %v195 = vld [vmem:[#allocation5 + $0x120] sm:$0xff]
    %v196 = vld [vmem:[#allocation5 + $0x128] sm:$0xff]
    %v197 = vld [vmem:[#allocation5 + $0x130] sm:$0xff]
    %v198 = vld [vmem:[#allocation5 + $0x138] sm:$0xff]
    %v199 = vld [vmem:[#allocation5 + $0x140] sm:$0xff]
    %v200 = vld [vmem:[#allocation5 + $0x148] sm:$0xff]
    %v201 = vld [vmem:[#allocation5 + $0x150] sm:$0xff]
    %v202 = vld [vmem:[#allocation5 + $0x158] sm:$0xff]
    %v203 = vld [vmem:[#allocation5 + $0x160] sm:$0xff]
    %v204 = vld [vmem:[#allocation5 + $0x168] sm:$0xff]
    %v205 = vld [vmem:[#allocation5 + $0x170] sm:$0xff]
    %v206 = vld [vmem:[#allocation5 + $0x178] sm:$0xff]
    %v207 = vld [vmem:[#allocation5 + $0x180] sm:$0xff]
    %v208 = vld [vmem:[#allocation5 + $0x188] sm:$0xff]
    %v209 = vld [vmem:[#allocation5 + $0x190] sm:$0xff]
    %v210 = vld [vmem:[#allocation5 + $0x198] sm:$0xff]
    %v211 = vld [vmem:[#allocation5 + $0x1a0] sm:$0xff]
    %v212 = vld [vmem:[#allocation5 + $0x1a8] sm:$0xff]
    %v213 = vld [vmem:[#allocation5 + $0x1b0] sm:$0xff]
    %v214 = vld [vmem:[#allocation5 + $0x1b8] sm:$0xff]
    %v215 = vld [vmem:[#allocation5 + $0x1c0] sm:$0xff]
    %v216 = vld [vmem:[#allocation5 + $0x1c8] sm:$0xff]
    %v217 = vld [vmem:[#allocation5 + $0x1d0] sm:$0xff]
    %v218 = vld [vmem:[#allocation5 + $0x1d8] sm:$0xff]
    %v219 = vld [vmem:[#allocation5 + $0x1e0] sm:$0xff]
    %v220 = vld [vmem:[#allocation5 + $0x1e8] sm:$0xff]
    %v221 = vld [vmem:[#allocation5 + $0x1f0] sm:$0xff]
    %v222 = vld [vmem:[#allocation5 + $0x1f8] sm:$0xff]
    %v223 = vld [vmem:[#allocation5 + $0x200] sm:$0xff]
    %v224 = vld [vmem:[#allocation5 + $0x208] sm:$0xff]
    %v225 = vld [vmem:[#allocation5 + $0x210] sm:$0xff]
    %v226 = vld [vmem:[#allocation5 + $0x218] sm:$0xff]
    %v227 = vld [vmem:[#allocation5 + $0x220] sm:$0xff]
    %v228 = vld [vmem:[#allocation5 + $0x228] sm:$0xff]
    %v229 = vld [vmem:[#allocation5 + $0x230] sm:$0xff]
    %v230 = vld [vmem:[#allocation5 + $0x238] sm:$0xff]
    %v231 = vld [vmem:[#allocation5 + $0x240] sm:$0xff]
    %v232 = vld [vmem:[#allocation5 + $0x248] sm:$0xff]
    %v233 = vld [vmem:[#allocation5 + $0x250] sm:$0xff]
    %v234 = vld [vmem:[#allocation5 + $0x258] sm:$0xff]
    %v235 = vld [vmem:[#allocation5 + $0x260] sm:$0xff]
    %v236 = vld [vmem:[#allocation5 + $0x268] sm:$0xff]
    %v237 = vld [vmem:[#allocation5 + $0x270] sm:$0xff]
    %v238 = vld [vmem:[#allocation5 + $0x278] sm:$0xff]
    %v239 = vld [vmem:[#allocation5 + $0x280] sm:$0xff]
    %v240 = vld [vmem:[#allocation5 + $0x288] sm:$0xff]
    %v241 = vld [vmem:[#allocation5 + $0x290] sm:$0xff]
    %v242 = vld [vmem:[#allocation5 + $0x298] sm:$0xff]
    %v243 = vld [vmem:[#allocation5 + $0x2a0] sm:$0xff]
    %v244 = vld [vmem:[#allocation5 + $0x2a8] sm:$0xff]
    %v245 = vld [vmem:[#allocation5 + $0x2b0] sm:$0xff]
    %v246 = vld [vmem:[#allocation5 + $0x2b8] sm:$0xff]
    %v247 = vld [vmem:[#allocation5 + $0x2c0] sm:$0xff]
    %v248 = vld [vmem:[#allocation5 + $0x2c8] sm:$0xff]
    %v249 = vld [vmem:[#allocation5 + $0x2d0] sm:$0xff]
    %v250 = vld [vmem:[#allocation5 + $0x2d8] sm:$0xff]
    %v251 = vld [vmem:[#allocation5 + $0x2e0] sm:$0xff]
    %v252 = vld [vmem:[#allocation5 + $0x2e8] sm:$0xff]
    %v253 = vld [vmem:[#allocation5 + $0x2f0] sm:$0xff]
    %v254 = vld [vmem:[#allocation5 + $0x2f8] sm:$0xff]
    %v255 = vld [vmem:[#allocation5 + $0x300] sm:$0xff]
    %v256 = vld [vmem:[#allocation5 + $0x308] sm:$0xff]
    %v257 = vld [vmem:[#allocation5 + $0x310] sm:$0xff]
    %v258 = vld [vmem:[#allocation5 + $0x318] sm:$0xff]
    %v259 = vld [vmem:[#allocation5 + $0x320] sm:$0xff]
    %v260 = vld [vmem:[#allocation5 + $0x328] sm:$0xff]
    %v261 = vld [vmem:[#allocation5 + $0x330] sm:$0xff]
    %v262 = vld [vmem:[#allocation5 + $0x338] sm:$0xff]
    %v263 = vld [vmem:[#allocation5 + $0x340] sm:$0xff]
    %v264 = vld [vmem:[#allocation5 + $0x348] sm:$0xff]
    %v265 = vld [vmem:[#allocation5 + $0x350] sm:$0xff]
    %v266 = vld [vmem:[#allocation5 + $0x358] sm:$0xff]
    %v267 = vld [vmem:[#allocation5 + $0x360] sm:$0xff]
    %v268 = vld [vmem:[#allocation5 + $0x368] sm:$0xff]
    %v269 = vld [vmem:[#allocation5 + $0x370] sm:$0xff]
    %v270 = vld [vmem:[#allocation5 + $0x378] sm:$0xff]
    %v271 = vld [vmem:[#allocation5 + $0x380] sm:$0xff]
    %v272 = vld [vmem:[#allocation5 + $0x388] sm:$0xff]
    %v273 = vld [vmem:[#allocation5 + $0x390] sm:$0xff]
    %v274 = vld [vmem:[#allocation5 + $0x398] sm:$0xff]
    %v275 = vld [vmem:[#allocation5 + $0x3a0] sm:$0xff]
    %v276 = vld [vmem:[#allocation5 + $0x3a8] sm:$0xff]
    %v277 = vld [vmem:[#allocation5 + $0x3b0] sm:$0xff]
    %v278 = vld [vmem:[#allocation5 + $0x3b8] sm:$0xff]
    %v279 = vld [vmem:[#allocation5 + $0x3c0] sm:$0xff]
    %v280 = vld [vmem:[#allocation5 + $0x3c8] sm:$0xff]
    %v281 = vld [vmem:[#allocation5 + $0x3d0] sm:$0xff]
    %v282 = vld [vmem:[#allocation5 + $0x3d8] sm:$0xff]
    %v283 = vld [vmem:[#allocation5 + $0x3e0] sm:$0xff]
    %v284 = vld [vmem:[#allocation5 + $0x3e8] sm:$0xff]
    %v285 = vld [vmem:[#allocation5 + $0x3f0] sm:$0xff]
    %v286 = vld [vmem:[#allocation5 + $0x3f8] sm:$0xff]
    %v287 = vld [vmem:[#allocation5 + $0x400] sm:$0xff]
    %v288 = vld [vmem:[#allocation5 + $0x408] sm:$0xff]
    %v289 = vld [vmem:[#allocation5 + $0x410] sm:$0xff]
    %v290 = vld [vmem:[#allocation5 + $0x418] sm:$0xff]
    %v291 = vld [vmem:[#allocation5 + $0x420] sm:$0xff]
    %v292 = vld [vmem:[#allocation5 + $0x428] sm:$0xff]
    %v293 = vld [vmem:[#allocation5 + $0x430] sm:$0xff]
    %v294 = vld [vmem:[#allocation5 + $0x438] sm:$0xff]
    %v295 = vld [vmem:[#allocation5 + $0x440] sm:$0xff]
    %v296 = vld [vmem:[#allocation5 + $0x448] sm:$0xff]
    %v297 = vld [vmem:[#allocation5 + $0x450] sm:$0xff]
    %v298 = vld [vmem:[#allocation5 + $0x458] sm:$0xff]
    %v299 = vld [vmem:[#allocation5 + $0x460] sm:$0xff]
    %v300 = vld [vmem:[#allocation5 + $0x468] sm:$0xff]
    %v301 = vld [vmem:[#allocation5 + $0x470] sm:$0xff]
    %v302 = vld [vmem:[#allocation5 + $0x478] sm:$0xff]
    %v303 = vld [vmem:[#allocation5 + $0x480] sm:$0xff]
    %v304 = vld [vmem:[#allocation5 + $0x488] sm:$0xff]
    %v305 = vld [vmem:[#allocation5 + $0x490] sm:$0xff]
    %v306 = vld [vmem:[#allocation5 + $0x498] sm:$0xff]
    %v307 = vld [vmem:[#allocation5 + $0x4a0] sm:$0xff]
    %v308 = vld [vmem:[#allocation5 + $0x4a8] sm:$0xff]
    %v309 = vld [vmem:[#allocation5 + $0x4b0] sm:$0xff]
    %v310 = vld [vmem:[#allocation5 + $0x4b8] sm:$0xff]
    %v311 = vld [vmem:[#allocation5 + $0x4c0] sm:$0xff]
    %v312 = vld [vmem:[#allocation5 + $0x4c8] sm:$0xff]
    %v313 = vld [vmem:[#allocation5 + $0x4d0] sm:$0xff]
    %v314 = vld [vmem:[#allocation5 + $0x4d8] sm:$0xff]
    %v315 = vld [vmem:[#allocation5 + $0x4e0] sm:$0xff]
    %v316 = vld [vmem:[#allocation5 + $0x4e8] sm:$0xff]
    %v317 = vld [vmem:[#allocation5 + $0x4f0] sm:$0xff]
    %v318 = vld [vmem:[#allocation5 + $0x4f8] sm:$0xff]
    %v319 = vld [vmem:[#allocation5 + $0x500] sm:$0xff]
    %v320 = vld [vmem:[#allocation5 + $0x508] sm:$0xff]
    %v321 = vld [vmem:[#allocation5 + $0x510] sm:$0xff]
    %v322 = vld [vmem:[#allocation5 + $0x518] sm:$0xff]
    %v323 = vld [vmem:[#allocation5 + $0x520] sm:$0xff]
    %v324 = vld [vmem:[#allocation5 + $0x528] sm:$0xff]
    %v325 = vld [vmem:[#allocation5 + $0x530] sm:$0xff]
    %v326 = vld [vmem:[#allocation5 + $0x538] sm:$0xff]
    %v327 = vld [vmem:[#allocation5 + $0x540] sm:$0xff]
    %v328 = vld [vmem:[#allocation5 + $0x548] sm:$0xff]
    %v329 = vld [vmem:[#allocation5 + $0x550] sm:$0xff]
    %v330 = vld [vmem:[#allocation5 + $0x558] sm:$0xff]
    %v331 = vld [vmem:[#allocation5 + $0x560] sm:$0xff]
    %v332 = vld [vmem:[#allocation5 + $0x568] sm:$0xff]
    %v333 = vld [vmem:[#allocation5 + $0x570] sm:$0xff]
    %v334 = vld [vmem:[#allocation5 + $0x578] sm:$0xff]
    %v335 = vld [vmem:[#allocation5 + $0x580] sm:$0xff]
    %v336 = vld [vmem:[#allocation5 + $0x588] sm:$0xff]
    %v337 = vld [vmem:[#allocation5 + $0x590] sm:$0xff]
    %v338 = vld [vmem:[#allocation5 + $0x598] sm:$0xff]
    %v339 = vld [vmem:[#allocation5 + $0x5a0] sm:$0xff]
    %v340 = vld [vmem:[#allocation5 + $0x5a8] sm:$0xff]
    %v341 = vld [vmem:[#allocation5 + $0x5b0] sm:$0xff]
    %v342 = vld [vmem:[#allocation5 + $0x5b8] sm:$0xff]
    %v343 = vld [vmem:[#allocation5 + $0x5c0] sm:$0xff]
    %v344 = vld [vmem:[#allocation5 + $0x5c8] sm:$0xff]
    %v345 = vld [vmem:[#allocation5 + $0x5d0] sm:$0xff]
    %v346 = vld [vmem:[#allocation5 + $0x5d8] sm:$0xff]
    %v347 = vld [vmem:[#allocation5 + $0x5e0] sm:$0xff]
    %v348 = vld [vmem:[#allocation5 + $0x5e8] sm:$0xff]
    %v349 = vld [vmem:[#allocation5 + $0x5f0] sm:$0xff]
    %v350 = vld [vmem:[#allocation5 + $0x5f8] sm:$0xff]
    %v351 = vld [vmem:[#allocation5 + $0x600] sm:$0xff]
    %v352 = vld [vmem:[#allocation5 + $0x608] sm:$0xff]
    %v353 = vld [vmem:[#allocation5 + $0x610] sm:$0xff]
    %v354 = vld [vmem:[#allocation5 + $0x618] sm:$0xff]
    %v355 = vld [vmem:[#allocation7] sm:$0xf]
    %v357 = vperm.slane %v355, 0
    %v358 = vperm.slane %v355, 1
    %v359 = vperm.slane %v355, 2
    %v360 = vperm.slane %v355, 3
    %v561 = vunpack.c.l.b16 %v159
    %v562 = vunpack.c.h.b16 %v159
    %v563 = vunpack.c.l.b16 %v160
    %v564 = vunpack.c.h.b16 %v160
    %v565 = vunpack.c.l.b16 %v161
    %v566 = vunpack.c.h.b16 %v161
    %v567 = vunpack.c.l.b16 %v162
    %v568 = vunpack.c.h.b16 %v162
    %v569 = vunpack.c.l.b16 %v163
    %v570 = vunpack.c.h.b16 %v163
    %v571 = vunpack.c.l.b16 %v164
    %v572 = vunpack.c.h.b16 %v164
    %v573 = vunpack.c.l.b16 %v165
    %v574 = vunpack.c.h.b16 %v165
    %v575 = vunpack.c.l.b16 %v166
    %v576 = vunpack.c.h.b16 %v166
    %v577 = vunpack.c.l.b16 %v167
    %v578 = vunpack.c.h.b16 %v167
    %v579 = vunpack.c.l.b16 %v168
    %v580 = vunpack.c.h.b16 %v168
    %v581 = vunpack.c.l.b16 %v169
    %v582 = vunpack.c.h.b16 %v169
    %v583 = vunpack.c.l.b16 %v170
    %v584 = vunpack.c.h.b16 %v170
    %v585 = vunpack.c.l.b16 %v171
    %v586 = vunpack.c.h.b16 %v171
    %v587 = vunpack.c.l.b16 %v172
    %v588 = vunpack.c.h.b16 %v172
    %v589 = vunpack.c.l.b16 %v173
    %v590 = vunpack.c.h.b16 %v173
    %v591 = vunpack.c.l.b16 %v174
    %v592 = vunpack.c.h.b16 %v174
    %v593 = vunpack.c.l.b16 %v175
    %v594 = vunpack.c.h.b16 %v175
    %v595 = vunpack.c.l.b16 %v176
    %v596 = vunpack.c.h.b16 %v176
    %v597 = vunpack.c.l.b16 %v177
    %v598 = vunpack.c.h.b16 %v177
    %v599 = vunpack.c.l.b16 %v178
    %v600 = vunpack.c.h.b16 %v178
    %v601 = vunpack.c.l.b16 %v179
    %v602 = vunpack.c.h.b16 %v179
    %v603 = vunpack.c.l.b16 %v180
    %v604 = vunpack.c.h.b16 %v180
    %v605 = vunpack.c.l.b16 %v181
    %v606 = vunpack.c.h.b16 %v181
    %v607 = vunpack.c.l.b16 %v182
    %v608 = vunpack.c.h.b16 %v182
    %v609 = vunpack.c.l.b16 %v183
    %v610 = vunpack.c.h.b16 %v183
    %v611 = vunpack.c.l.b16 %v184
    %v612 = vunpack.c.h.b16 %v184
    %v613 = vunpack.c.l.b16 %v185
    %v614 = vunpack.c.h.b16 %v185
    %v615 = vunpack.c.l.b16 %v186
    %v616 = vunpack.c.h.b16 %v186
    %v617 = vunpack.c.l.b16 %v187
    %v618 = vunpack.c.h.b16 %v187
    %v619 = vunpack.c.l.b16 %v188
    %v620 = vunpack.c.h.b16 %v188
    %v621 = vunpack.c.l.b16 %v189
    %v622 = vunpack.c.h.b16 %v189
    %v623 = vunpack.c.l.b16 %v190
    %v624 = vunpack.c.h.b16 %v190
    %v625 = vunpack.c.l.b16 %v191
    %v626 = vunpack.c.h.b16 %v191
    %v627 = vunpack.c.l.b16 %v192
    %v628 = vunpack.c.h.b16 %v192
    %v629 = vunpack.c.l.b16 %v193
    %v630 = vunpack.c.h.b16 %v193
    %v631 = vunpack.c.l.b16 %v194
    %v632 = vunpack.c.h.b16 %v194
    %v633 = vunpack.c.l.b16 %v195
    %v634 = vunpack.c.h.b16 %v195
    %v635 = vunpack.c.l.b16 %v196
    %v636 = vunpack.c.h.b16 %v196
    %v637 = vunpack.c.l.b16 %v197
    %v638 = vunpack.c.h.b16 %v197
    %v639 = vunpack.c.l.b16 %v198
    %v640 = vunpack.c.h.b16 %v198
    %v641 = vunpack.c.l.b16 %v199
    %v642 = vunpack.c.h.b16 %v199
    %v643 = vunpack.c.l.b16 %v200
    %v644 = vunpack.c.h.b16 %v200
    %v645 = vunpack.c.l.b16 %v201
    %v646 = vunpack.c.h.b16 %v201
    %v647 = vunpack.c.l.b16 %v202
    %v648 = vunpack.c.h.b16 %v202
    %v649 = vunpack.c.l.b16 %v203
    %v650 = vunpack.c.h.b16 %v203
    %v651 = vunpack.c.l.b16 %v204
    %v652 = vunpack.c.h.b16 %v204
    %v653 = vunpack.c.l.b16 %v205
    %v654 = vunpack.c.h.b16 %v205
    %v655 = vunpack.c.l.b16 %v206
    %v656 = vunpack.c.h.b16 %v206
    %v657 = vunpack.c.l.b16 %v207
    %v658 = vunpack.c.h.b16 %v207
    %v659 = vunpack.c.l.b16 %v208
    %v660 = vunpack.c.h.b16 %v208
    %v661 = vunpack.c.l.b16 %v209
    %v662 = vunpack.c.h.b16 %v209
    %v663 = vunpack.c.l.b16 %v210
    %v664 = vunpack.c.h.b16 %v210
    %v665 = vunpack.c.l.b16 %v211
    %v666 = vunpack.c.h.b16 %v211
    %v667 = vunpack.c.l.b16 %v212
    %v668 = vunpack.c.h.b16 %v212
    %v669 = vunpack.c.l.b16 %v213
    %v670 = vunpack.c.h.b16 %v213
    %v671 = vunpack.c.l.b16 %v214
    %v672 = vunpack.c.h.b16 %v214
    %v673 = vunpack.c.l.b16 %v215
    %v674 = vunpack.c.h.b16 %v215
    %v675 = vunpack.c.l.b16 %v216
    %v676 = vunpack.c.h.b16 %v216
    %v677 = vunpack.c.l.b16 %v217
    %v678 = vunpack.c.h.b16 %v217
    %v679 = vunpack.c.l.b16 %v218
    %v680 = vunpack.c.h.b16 %v218
    %v681 = vunpack.c.l.b16 %v219
    %v682 = vunpack.c.h.b16 %v219
    %v683 = vunpack.c.l.b16 %v220
    %v684 = vunpack.c.h.b16 %v220
    %v685 = vunpack.c.l.b16 %v221
    %v686 = vunpack.c.h.b16 %v221
    %v687 = vunpack.c.l.b16 %v222
    %v688 = vunpack.c.h.b16 %v222
    %v689 = vunpack.c.l.b16 %v223
    %v690 = vunpack.c.h.b16 %v223
    %v691 = vunpack.c.l.b16 %v224
    %v692 = vunpack.c.h.b16 %v224
    %v693 = vunpack.c.l.b16 %v225
    %v694 = vunpack.c.h.b16 %v225
    %v695 = vunpack.c.l.b16 %v226
    %v696 = vunpack.c.h.b16 %v226
    %v697 = vunpack.c.l.b16 %v227
    %v698 = vunpack.c.h.b16 %v227
    %v699 = vunpack.c.l.b16 %v228
    %v700 = vunpack.c.h.b16 %v228
    %v701 = vunpack.c.l.b16 %v229
    %v702 = vunpack.c.h.b16 %v229
    %v703 = vunpack.c.l.b16 %v230
    %v704 = vunpack.c.h.b16 %v230
    %v705 = vunpack.c.l.b16 %v231
    %v706 = vunpack.c.h.b16 %v231
    %v707 = vunpack.c.l.b16 %v232
    %v708 = vunpack.c.h.b16 %v232
    %v709 = vunpack.c.l.b16 %v233
    %v710 = vunpack.c.h.b16 %v233
    %v711 = vunpack.c.l.b16 %v234
    %v712 = vunpack.c.h.b16 %v234
    %v713 = vunpack.c.l.b16 %v235
    %v714 = vunpack.c.h.b16 %v235
    %v715 = vunpack.c.l.b16 %v236
    %v716 = vunpack.c.h.b16 %v236
    %v717 = vunpack.c.l.b16 %v237
    %v718 = vunpack.c.h.b16 %v237
    %v719 = vunpack.c.l.b16 %v238
    %v720 = vunpack.c.h.b16 %v238
    %v721 = vunpack.c.l.b16 %v239
    %v722 = vunpack.c.h.b16 %v239
    %v723 = vunpack.c.l.b16 %v240
    %v724 = vunpack.c.h.b16 %v240
    %v725 = vunpack.c.l.b16 %v241
    %v726 = vunpack.c.h.b16 %v241
    %v727 = vunpack.c.l.b16 %v242
    %v728 = vunpack.c.h.b16 %v242
    %v729 = vunpack.c.l.b16 %v243
    %v730 = vunpack.c.h.b16 %v243
    %v731 = vunpack.c.l.b16 %v244
    %v732 = vunpack.c.h.b16 %v244
    %v733 = vunpack.c.l.b16 %v245
    %v734 = vunpack.c.h.b16 %v245
    %v735 = vunpack.c.l.b16 %v246
    %v736 = vunpack.c.h.b16 %v246
    %v737 = vunpack.c.l.b16 %v247
    %v738 = vunpack.c.h.b16 %v247
    %v739 = vunpack.c.l.b16 %v248
    %v740 = vunpack.c.h.b16 %v248
    %v741 = vunpack.c.l.b16 %v249
    %v742 = vunpack.c.h.b16 %v249
    %v743 = vunpack.c.l.b16 %v250
    %v744 = vunpack.c.h.b16 %v250
    %v745 = vunpack.c.l.b16 %v251
    %v746 = vunpack.c.h.b16 %v251
    %v747 = vunpack.c.l.b16 %v252
    %v748 = vunpack.c.h.b16 %v252
    %v749 = vunpack.c.l.b16 %v253
    %v750 = vunpack.c.h.b16 %v253
    %v751 = vunpack.c.l.b16 %v254
    %v752 = vunpack.c.h.b16 %v254
    %v753 = vunpack.c.l.b16 %v255
    %v754 = vunpack.c.h.b16 %v255
    %v755 = vunpack.c.l.b16 %v256
    %v756 = vunpack.c.h.b16 %v256
    %v757 = vunpack.c.l.b16 %v257
    %v758 = vunpack.c.h.b16 %v257
    %v759 = vunpack.c.l.b16 %v258
    %v760 = vunpack.c.h.b16 %v258
    %v761 = vunpack.c.l.b16 %v259
    %v762 = vunpack.c.h.b16 %v259
    %v763 = vunpack.c.l.b16 %v260
    %v764 = vunpack.c.h.b16 %v260
    %v765 = vunpack.c.l.b16 %v261
    %v766 = vunpack.c.h.b16 %v261
    %v767 = vunpack.c.l.b16 %v262
    %v768 = vunpack.c.h.b16 %v262
    %v769 = vunpack.c.l.b16 %v263
    %v770 = vunpack.c.h.b16 %v263
    %v771 = vunpack.c.l.b16 %v264
    %v772 = vunpack.c.h.b16 %v264
    %v773 = vunpack.c.l.b16 %v265
    %v774 = vunpack.c.h.b16 %v265
    %v775 = vunpack.c.l.b16 %v266
    %v776 = vunpack.c.h.b16 %v266
    %v777 = vunpack.c.l.b16 %v267
    %v778 = vunpack.c.h.b16 %v267
    %v779 = vunpack.c.l.b16 %v268
    %v780 = vunpack.c.h.b16 %v268
    %v781 = vunpack.c.l.b16 %v269
    %v782 = vunpack.c.h.b16 %v269
    %v783 = vunpack.c.l.b16 %v270
    %v784 = vunpack.c.h.b16 %v270
    %v785 = vunpack.c.l.b16 %v271
    %v786 = vunpack.c.h.b16 %v271
    %v787 = vunpack.c.l.b16 %v272
    %v788 = vunpack.c.h.b16 %v272
    %v789 = vunpack.c.l.b16 %v273
    %v790 = vunpack.c.h.b16 %v273
    %v791 = vunpack.c.l.b16 %v274
    %v792 = vunpack.c.h.b16 %v274
    %v793 = vunpack.c.l.b16 %v275
    %v794 = vunpack.c.h.b16 %v275
    %v795 = vunpack.c.l.b16 %v276
    %v796 = vunpack.c.h.b16 %v276
    %v797 = vunpack.c.l.b16 %v277
    %v798 = vunpack.c.h.b16 %v277
    %v799 = vunpack.c.l.b16 %v278
    %v800 = vunpack.c.h.b16 %v278
    %v801 = vunpack.c.l.b16 %v279
    %v802 = vunpack.c.h.b16 %v279
    %v803 = vunpack.c.l.b16 %v280
    %v804 = vunpack.c.h.b16 %v280
    %v805 = vunpack.c.l.b16 %v281
    %v806 = vunpack.c.h.b16 %v281
    %v807 = vunpack.c.l.b16 %v282
    %v808 = vunpack.c.h.b16 %v282
    %v809 = vunpack.c.l.b16 %v283
    %v810 = vunpack.c.h.b16 %v283
    %v811 = vunpack.c.l.b16 %v284
    %v812 = vunpack.c.h.b16 %v284
    %v813 = vunpack.c.l.b16 %v285
    %v814 = vunpack.c.h.b16 %v285
    %v815 = vunpack.c.l.b16 %v286
    %v816 = vunpack.c.h.b16 %v286
    %v817 = vunpack.c.l.b16 %v287
    %v818 = vunpack.c.h.b16 %v287
    %v819 = vunpack.c.l.b16 %v288
    %v820 = vunpack.c.h.b16 %v288
    %v821 = vunpack.c.l.b16 %v289
    %v822 = vunpack.c.h.b16 %v289
    %v823 = vunpack.c.l.b16 %v290
    %v824 = vunpack.c.h.b16 %v290
    %v825 = vunpack.c.l.b16 %v291
    %v826 = vunpack.c.h.b16 %v291
    %v827 = vunpack.c.l.b16 %v292
    %v828 = vunpack.c.h.b16 %v292
    %v829 = vunpack.c.l.b16 %v293
    %v830 = vunpack.c.h.b16 %v293
    %v831 = vunpack.c.l.b16 %v294
    %v832 = vunpack.c.h.b16 %v294
    %v833 = vunpack.c.l.b16 %v295
    %v834 = vunpack.c.h.b16 %v295
    %v835 = vunpack.c.l.b16 %v296
    %v836 = vunpack.c.h.b16 %v296
    %v837 = vunpack.c.l.b16 %v297
    %v838 = vunpack.c.h.b16 %v297
    %v839 = vunpack.c.l.b16 %v298
    %v840 = vunpack.c.h.b16 %v298
    %v841 = vunpack.c.l.b16 %v299
    %v842 = vunpack.c.h.b16 %v299
    %v843 = vunpack.c.l.b16 %v300
    %v844 = vunpack.c.h.b16 %v300
    %v845 = vunpack.c.l.b16 %v301
    %v846 = vunpack.c.h.b16 %v301
    %v847 = vunpack.c.l.b16 %v302
    %v848 = vunpack.c.h.b16 %v302
    %v849 = vunpack.c.l.b16 %v303
    %v850 = vunpack.c.h.b16 %v303
    %v851 = vunpack.c.l.b16 %v304
    %v852 = vunpack.c.h.b16 %v304
    %v853 = vunpack.c.l.b16 %v305
    %v854 = vunpack.c.h.b16 %v305
    %v855 = vunpack.c.l.b16 %v306
    %v856 = vunpack.c.h.b16 %v306
    %v857 = vunpack.c.l.b16 %v307
    %v858 = vunpack.c.h.b16 %v307
    %v859 = vunpack.c.l.b16 %v308
    %v860 = vunpack.c.h.b16 %v308
    %v861 = vunpack.c.l.b16 %v309
    %v862 = vunpack.c.h.b16 %v309
    %v863 = vunpack.c.l.b16 %v310
    %v864 = vunpack.c.h.b16 %v310
    %v865 = vunpack.c.l.b16 %v311
    %v866 = vunpack.c.h.b16 %v311
    %v867 = vunpack.c.l.b16 %v312
    %v868 = vunpack.c.h.b16 %v312
    %v869 = vunpack.c.l.b16 %v313
    %v870 = vunpack.c.h.b16 %v313
    %v871 = vunpack.c.l.b16 %v314
    %v872 = vunpack.c.h.b16 %v314
    %v873 = vunpack.c.l.b16 %v315
    %v874 = vunpack.c.h.b16 %v315
    %v875 = vunpack.c.l.b16 %v316
    %v876 = vunpack.c.h.b16 %v316
    %v877 = vunpack.c.l.b16 %v317
    %v878 = vunpack.c.h.b16 %v317
    %v879 = vunpack.c.l.b16 %v318
    %v880 = vunpack.c.h.b16 %v318
    %v881 = vunpack.c.l.b16 %v319
    %v882 = vunpack.c.h.b16 %v319
    %v883 = vunpack.c.l.b16 %v320
    %v884 = vunpack.c.h.b16 %v320
    %v885 = vunpack.c.l.b16 %v321
    %v886 = vunpack.c.h.b16 %v321
    %v887 = vunpack.c.l.b16 %v322
    %v888 = vunpack.c.h.b16 %v322
    %v889 = vunpack.c.l.b16 %v323
    %v890 = vunpack.c.h.b16 %v323
    %v891 = vunpack.c.l.b16 %v324
    %v892 = vunpack.c.h.b16 %v324
    %v893 = vunpack.c.l.b16 %v325
    %v894 = vunpack.c.h.b16 %v325
    %v895 = vunpack.c.l.b16 %v326
    %v896 = vunpack.c.h.b16 %v326
    %v897 = vunpack.c.l.b16 %v327
    %v898 = vunpack.c.h.b16 %v327
    %v899 = vunpack.c.l.b16 %v328
    %v900 = vunpack.c.h.b16 %v328
    %v901 = vunpack.c.l.b16 %v329
    %v902 = vunpack.c.h.b16 %v329
    %v903 = vunpack.c.l.b16 %v330
    %v904 = vunpack.c.h.b16 %v330
    %v905 = vunpack.c.l.b16 %v331
    %v906 = vunpack.c.h.b16 %v331
    %v907 = vunpack.c.l.b16 %v332
    %v908 = vunpack.c.h.b16 %v332
    %v909 = vunpack.c.l.b16 %v333
    %v910 = vunpack.c.h.b16 %v333
    %v911 = vunpack.c.l.b16 %v334
    %v912 = vunpack.c.h.b16 %v334
    %v913 = vunpack.c.l.b16 %v335
    %v914 = vunpack.c.h.b16 %v335
    %v915 = vunpack.c.l.b16 %v336
    %v916 = vunpack.c.h.b16 %v336
    %v917 = vunpack.c.l.b16 %v337
    %v918 = vunpack.c.h.b16 %v337
    %v919 = vunpack.c.l.b16 %v338
    %v920 = vunpack.c.h.b16 %v338
    %v921 = vunpack.c.l.b16 %v339
    %v922 = vunpack.c.h.b16 %v339
    %v923 = vunpack.c.l.b16 %v340
    %v924 = vunpack.c.h.b16 %v340
    %v925 = vunpack.c.l.b16 %v341
    %v926 = vunpack.c.h.b16 %v341
    %v927 = vunpack.c.l.b16 %v342
    %v928 = vunpack.c.h.b16 %v342
    %v929 = vunpack.c.l.b16 %v343
    %v930 = vunpack.c.h.b16 %v343
    %v931 = vunpack.c.l.b16 %v344
    %v932 = vunpack.c.h.b16 %v344
    %v933 = vunpack.c.l.b16 %v345
    %v934 = vunpack.c.h.b16 %v345
    %v935 = vunpack.c.l.b16 %v346
    %v936 = vunpack.c.h.b16 %v346
    %v937 = vunpack.c.l.b16 %v347
    %v938 = vunpack.c.h.b16 %v347
    %v939 = vunpack.c.l.b16 %v348
    %v940 = vunpack.c.h.b16 %v348
    %v941 = vunpack.c.l.b16 %v349
    %v942 = vunpack.c.h.b16 %v349
    %v943 = vunpack.c.l.b16 %v350
    %v944 = vunpack.c.h.b16 %v350
    %v945 = vunpack.c.l.b16 %v351
    %v946 = vunpack.c.h.b16 %v351
    %v947 = vunpack.c.l.b16 %v352
    %v948 = vunpack.c.h.b16 %v352
    %v949 = vunpack.c.l.b16 %v353
    %v950 = vunpack.c.h.b16 %v353
    %v951 = vunpack.c.l.b16 %v354
    %v952 = vunpack.c.h.b16 %v354
    %v953 = vpack.c.b16 %v565, %v561
    %v954 = vpack.c.b16 %v566, %v562
    %v955 = vpack.c.b16 %v567, %v563
    %v956 = vpack.c.b16 %v568, %v564
    %v957 = vpack.c.b16 %v573, %v569
    %v958 = vpack.c.b16 %v574, %v570
    %v959 = vpack.c.b16 %v575, %v571
    %v960 = vpack.c.b16 %v576, %v572
    %v961 = vpack.c.b16 %v581, %v577
    %v962 = vpack.c.b16 %v582, %v578
    %v963 = vpack.c.b16 %v583, %v579
    %v964 = vpack.c.b16 %v584, %v580
    %v965 = vpack.c.b16 %v589, %v585
    %v966 = vpack.c.b16 %v590, %v586
    %v967 = vpack.c.b16 %v591, %v587
    %v968 = vpack.c.b16 %v592, %v588
    %v969 = vpack.c.b16 %v597, %v593
    %v970 = vpack.c.b16 %v598, %v594
    %v971 = vpack.c.b16 %v599, %v595
    %v972 = vpack.c.b16 %v600, %v596
    %v973 = vpack.c.b16 %v605, %v601
    %v974 = vpack.c.b16 %v606, %v602
    %v975 = vpack.c.b16 %v607, %v603
    %v976 = vpack.c.b16 %v608, %v604
    %v977 = vpack.c.b16 %v613, %v609
    %v978 = vpack.c.b16 %v614, %v610
    %v979 = vpack.c.b16 %v615, %v611
    %v980 = vpack.c.b16 %v616, %v612
    %v981 = vpack.c.b16 %v621, %v617
    %v982 = vpack.c.b16 %v622, %v618
    %v983 = vpack.c.b16 %v623, %v619
    %v984 = vpack.c.b16 %v624, %v620
    %v985 = vpack.c.b16 %v629, %v625
    %v986 = vpack.c.b16 %v630, %v626
    %v987 = vpack.c.b16 %v631, %v627
    %v988 = vpack.c.b16 %v632, %v628
    %v989 = vpack.c.b16 %v637, %v633
    %v990 = vpack.c.b16 %v638, %v634
    %v991 = vpack.c.b16 %v639, %v635
    %v992 = vpack.c.b16 %v640, %v636
    %v993 = vpack.c.b16 %v645, %v641
    %v994 = vpack.c.b16 %v646, %v642
    %v995 = vpack.c.b16 %v647, %v643
    %v996 = vpack.c.b16 %v648, %v644
    %v997 = vpack.c.b16 %v653, %v649
    %v998 = vpack.c.b16 %v654, %v650
    %v999 = vpack.c.b16 %v655, %v651
    %v1000 = vpack.c.b16 %v656, %v652
    %v1001 = vpack.c.b16 %v661, %v657
    %v1002 = vpack.c.b16 %v662, %v658
    %v1003 = vpack.c.b16 %v663, %v659
    %v1004 = vpack.c.b16 %v664, %v660
    %v1005 = vpack.c.b16 %v669, %v665
    %v1006 = vpack.c.b16 %v670, %v666
    %v1007 = vpack.c.b16 %v671, %v667
    %v1008 = vpack.c.b16 %v672, %v668
    %v1009 = vpack.c.b16 %v677, %v673
    %v1010 = vpack.c.b16 %v678, %v674
    %v1011 = vpack.c.b16 %v679, %v675
    %v1012 = vpack.c.b16 %v680, %v676
    %v1013 = vpack.c.b16 %v685, %v681
    %v1014 = vpack.c.b16 %v686, %v682
    %v1015 = vpack.c.b16 %v687, %v683
    %v1016 = vpack.c.b16 %v688, %v684
    %v1017 = vpack.c.b16 %v693, %v689
    %v1018 = vpack.c.b16 %v694, %v690
    %v1019 = vpack.c.b16 %v695, %v691
    %v1020 = vpack.c.b16 %v696, %v692
    %v1021 = vpack.c.b16 %v701, %v697
    %v1022 = vpack.c.b16 %v702, %v698
    %v1023 = vpack.c.b16 %v703, %v699
    %v1024 = vpack.c.b16 %v704, %v700
    %v1025 = vpack.c.b16 %v709, %v705
    %v1026 = vpack.c.b16 %v710, %v706
    %v1027 = vpack.c.b16 %v711, %v707
    %v1028 = vpack.c.b16 %v712, %v708
    %v1029 = vpack.c.b16 %v717, %v713
    %v1030 = vpack.c.b16 %v718, %v714
    %v1031 = vpack.c.b16 %v719, %v715
    %v1032 = vpack.c.b16 %v720, %v716
    %v1033 = vpack.c.b16 %v725, %v721
    %v1034 = vpack.c.b16 %v726, %v722
    %v1035 = vpack.c.b16 %v727, %v723
    %v1036 = vpack.c.b16 %v728, %v724
    %v1037 = vpack.c.b16 %v733, %v729
    %v1038 = vpack.c.b16 %v734, %v730
    %v1039 = vpack.c.b16 %v735, %v731
    %v1040 = vpack.c.b16 %v736, %v732
    %v1041 = vpack.c.b16 %v741, %v737
    %v1042 = vpack.c.b16 %v742, %v738
    %v1043 = vpack.c.b16 %v743, %v739
    %v1044 = vpack.c.b16 %v744, %v740
    %v1045 = vpack.c.b16 %v749, %v745
    %v1046 = vpack.c.b16 %v750, %v746
    %v1047 = vpack.c.b16 %v751, %v747
    %v1048 = vpack.c.b16 %v752, %v748
    %v1049 = vpack.c.b16 %v757, %v753
    %v1050 = vpack.c.b16 %v758, %v754
    %v1051 = vpack.c.b16 %v759, %v755
    %v1052 = vpack.c.b16 %v760, %v756
    %v1053 = vpack.c.b16 %v765, %v761
    %v1054 = vpack.c.b16 %v766, %v762
    %v1055 = vpack.c.b16 %v767, %v763
    %v1056 = vpack.c.b16 %v768, %v764
    %v1057 = vpack.c.b16 %v773, %v769
    %v1058 = vpack.c.b16 %v774, %v770
    %v1059 = vpack.c.b16 %v775, %v771
    %v1060 = vpack.c.b16 %v776, %v772
    %v1061 = vpack.c.b16 %v781, %v777
    %v1062 = vpack.c.b16 %v782, %v778
    %v1063 = vpack.c.b16 %v783, %v779
    %v1064 = vpack.c.b16 %v784, %v780
    %v1065 = vpack.c.b16 %v789, %v785
    %v1066 = vpack.c.b16 %v790, %v786
    %v1067 = vpack.c.b16 %v791, %v787
    %v1068 = vpack.c.b16 %v792, %v788
    %v1069 = vpack.c.b16 %v797, %v793
    %v1070 = vpack.c.b16 %v798, %v794
    %v1071 = vpack.c.b16 %v799, %v795
    %v1072 = vpack.c.b16 %v800, %v796
    %v1073 = vpack.c.b16 %v805, %v801
    %v1074 = vpack.c.b16 %v806, %v802
    %v1075 = vpack.c.b16 %v807, %v803
    %v1076 = vpack.c.b16 %v808, %v804
    %v1077 = vpack.c.b16 %v813, %v809
    %v1078 = vpack.c.b16 %v814, %v810
    %v1079 = vpack.c.b16 %v815, %v811
    %v1080 = vpack.c.b16 %v816, %v812
    %v1081 = vpack.c.b16 %v821, %v817
    %v1082 = vpack.c.b16 %v822, %v818
    %v1083 = vpack.c.b16 %v823, %v819
    %v1084 = vpack.c.b16 %v824, %v820
    %v1085 = vpack.c.b16 %v829, %v825
    %v1086 = vpack.c.b16 %v830, %v826
    %v1087 = vpack.c.b16 %v831, %v827
    %v1088 = vpack.c.b16 %v832, %v828
    %v1089 = vpack.c.b16 %v837, %v833
    %v1090 = vpack.c.b16 %v838, %v834
    %v1091 = vpack.c.b16 %v839, %v835
    %v1092 = vpack.c.b16 %v840, %v836
    %v1093 = vpack.c.b16 %v845, %v841
    %v1094 = vpack.c.b16 %v846, %v842
    %v1095 = vpack.c.b16 %v847, %v843
    %v1096 = vpack.c.b16 %v848, %v844
    %v1097 = vpack.c.b16 %v853, %v849
    %v1098 = vpack.c.b16 %v854, %v850
    %v1099 = vpack.c.b16 %v855, %v851
    %v1100 = vpack.c.b16 %v856, %v852
    %v1101 = vpack.c.b16 %v861, %v857
    %v1102 = vpack.c.b16 %v862, %v858
    %v1103 = vpack.c.b16 %v863, %v859
    %v1104 = vpack.c.b16 %v864, %v860
    %v1105 = vpack.c.b16 %v869, %v865
    %v1106 = vpack.c.b16 %v870, %v866
    %v1107 = vpack.c.b16 %v871, %v867
    %v1108 = vpack.c.b16 %v872, %v868
    %v1109 = vpack.c.b16 %v877, %v873
    %v1110 = vpack.c.b16 %v878, %v874
    %v1111 = vpack.c.b16 %v879, %v875
    %v1112 = vpack.c.b16 %v880, %v876
    %v1113 = vpack.c.b16 %v885, %v881
    %v1114 = vpack.c.b16 %v886, %v882
    %v1115 = vpack.c.b16 %v887, %v883
    %v1116 = vpack.c.b16 %v888, %v884
    %v1117 = vpack.c.b16 %v893, %v889
    %v1118 = vpack.c.b16 %v894, %v890
    %v1119 = vpack.c.b16 %v895, %v891
    %v1120 = vpack.c.b16 %v896, %v892
    %v1121 = vpack.c.b16 %v901, %v897
    %v1122 = vpack.c.b16 %v902, %v898
    %v1123 = vpack.c.b16 %v903, %v899
    %v1124 = vpack.c.b16 %v904, %v900
    %v1125 = vpack.c.b16 %v909, %v905
    %v1126 = vpack.c.b16 %v910, %v906
    %v1127 = vpack.c.b16 %v911, %v907
    %v1128 = vpack.c.b16 %v912, %v908
    %v1129 = vpack.c.b16 %v917, %v913
    %v1130 = vpack.c.b16 %v918, %v914
    %v1131 = vpack.c.b16 %v919, %v915
    %v1132 = vpack.c.b16 %v920, %v916
    %v1133 = vpack.c.b16 %v925, %v921
    %v1134 = vpack.c.b16 %v926, %v922
    %v1135 = vpack.c.b16 %v927, %v923
    %v1136 = vpack.c.b16 %v928, %v924
    %v1137 = vpack.c.b16 %v933, %v929
    %v1138 = vpack.c.b16 %v934, %v930
    %v1139 = vpack.c.b16 %v935, %v931
    %v1140 = vpack.c.b16 %v936, %v932
    %v1141 = vpack.c.b16 %v941, %v937
    %v1142 = vpack.c.b16 %v942, %v938
    %v1143 = vpack.c.b16 %v943, %v939
    %v1144 = vpack.c.b16 %v944, %v940
    %v1145 = vpack.c.b16 %v949, %v945
    %v1146 = vpack.c.b16 %v950, %v946
    %v1147 = vpack.c.b16 %v951, %v947
    %v1148 = vpack.c.b16 %v952, %v948
    %vm1345 = vcmask 130048
    %v1347 = vsel %vm1345, %v158, 0
    %1349 = vmatpush.bf16.msra.mxu0 %v981
    %1350 = vmatpush.bf16.msra.mxu0 %v977
    %1351 = vmatpush.bf16.msra.mxu0 %v973
    %1352 = vmatpush.bf16.msra.mxu0 %v969
    %1353 = vmatpush.bf16.msra.mxu0 %v965
    %1354 = vmatpush.bf16.msra.mxu0 %v961
    %1355 = vmatpush.bf16.msra.mxu0 %v957
    %1356 = vmatpush.bf16.msra.mxu0 %v953
    %1357 = vmatmul.bf16.gmra.mxu0 %v152
    %v1358 = vpop.f32.mrf.mxu0
    %v1359 = vadd.f32 %v357, %v1358
    %v1360 = vpop.f32.mrf.mxu0
    %1361 = vdwg.mxu0
    %1362 = vmatpush.bf16.msra.mxu0 %v1013
    %1363 = vmatpush.bf16.msra.mxu0 %v1009
    %1364 = vmatpush.bf16.msra.mxu0 %v1005
    %1365 = vmatpush.bf16.msra.mxu0 %v1001
    %1366 = vmatpush.bf16.msra.mxu0 %v997
    %1367 = vmatpush.bf16.msra.mxu0 %v993
    %1368 = vmatpush.bf16.msra.mxu0 %v989
    %1369 = vmatpush.bf16.msra.mxu0 %v985
    %1370 = vmatmul.bf16.gmra.mxu0 %v153
    %v1371 = vpop.f32.mrf.mxu0
    %v1372 = vadd.f32 %v1359, %v1371
    %v1373 = vpop.f32.mrf.mxu0
    %1374 = vdwg.mxu0
    %1375 = vmatpush.bf16.msra.mxu0 %v1045
    %1376 = vmatpush.bf16.msra.mxu0 %v1041
    %1377 = vmatpush.bf16.msra.mxu0 %v1037
    %1378 = vmatpush.bf16.msra.mxu0 %v1033
    %1379 = vmatpush.bf16.msra.mxu0 %v1029
    %1380 = vmatpush.bf16.msra.mxu0 %v1025
    %1381 = vmatpush.bf16.msra.mxu0 %v1021
    %1382 = vmatpush.bf16.msra.mxu0 %v1017
    %1383 = vmatmul.bf16.gmra.mxu0 %v154
    %v1384 = vpop.f32.mrf.mxu0
    %v1385 = vadd.f32 %v1372, %v1384
    %v1386 = vpop.f32.mrf.mxu0
    %1387 = vdwg.mxu0
    %1388 = vmatpush.bf16.msra.mxu0 %v1077
    %1389 = vmatpush.bf16.msra.mxu0 %v1073
    %1390 = vmatpush.bf16.msra.mxu0 %v1069
    %1391 = vmatpush.bf16.msra.mxu0 %v1065
    %1392 = vmatpush.bf16.msra.mxu0 %v1061
    %1393 = vmatpush.bf16.msra.mxu0 %v1057
    %1394 = vmatpush.bf16.msra.mxu0 %v1053
    %1395 = vmatpush.bf16.msra.mxu0 %v1049
    %1396 = vmatmul.bf16.gmra.mxu0 %v155
    %v1397 = vpop.f32.mrf.mxu0
    %v1398 = vadd.f32 %v1385, %v1397
    %v1399 = vpop.f32.mrf.mxu0
    %1400 = vdwg.mxu0
    %1401 = vmatpush.bf16.msra.mxu0 %v1109
    %1402 = vmatpush.bf16.msra.mxu0 %v1105
    %1403 = vmatpush.bf16.msra.mxu0 %v1101
    %1404 = vmatpush.bf16.msra.mxu0 %v1097
    %1405 = vmatpush.bf16.msra.mxu0 %v1093
    %1406 = vmatpush.bf16.msra.mxu0 %v1089
    %1407 = vmatpush.bf16.msra.mxu0 %v1085
    %1408 = vmatpush.bf16.msra.mxu0 %v1081
    %1409 = vmatmul.bf16.gmra.mxu0 %v156
    %v1410 = vpop.f32.mrf.mxu0
    %v1411 = vadd.f32 %v1398, %v1410
    %v1412 = vpop.f32.mrf.mxu0
    %1413 = vdwg.mxu0
    %1414 = vmatpush.bf16.msra.mxu0 %v1141
    %1415 = vmatpush.bf16.msra.mxu0 %v1137
    %1416 = vmatpush.bf16.msra.mxu0 %v1133
    %1417 = vmatpush.bf16.msra.mxu0 %v1129
    %1418 = vmatpush.bf16.msra.mxu0 %v1125
    %1419 = vmatpush.bf16.msra.mxu0 %v1121
    %1420 = vmatpush.bf16.msra.mxu0 %v1117
    %1421 = vmatpush.bf16.msra.mxu0 %v1113
    %1422 = vmatmul.bf16.gmra.mxu0 %v157
    %v1423 = vpop.f32.mrf.mxu0
    %v1424 = vadd.f32 %v1411, %v1423
    %v1425 = vpop.f32.mrf.mxu0
    %1426 = vdwg.mxu0
    %1427 = vmatpush.bf16.msra.mxu0 0
    %1428 = vmatpush.bf16.msra.mxu0 0
    %1429 = vmatpush.bf16.msra.mxu0 0
    %1430 = vmatpush.bf16.msra.mxu0 0
    %1431 = vmatpush.bf16.msra.mxu0 0
    %1432 = vmatpush.bf16.msra.mxu0 0
    %1433 = vmatpush.bf16.msra.mxu0 0
    %1434 = vmatpush.bf16.msra.mxu0 %v1145
    %1435 = vmatmul.bf16.gmra.mxu0 %v1347
    %v1436 = vpop.f32.mrf.mxu0
    %v1437 = vadd.f32 %v1424, %v1436
    %v1438 = vpop.f32.mrf.mxu0
    %1439 = vdwg.mxu0
    %1440 = vmatpush.bf16.msra.mxu0 %v982
    %1441 = vmatpush.bf16.msra.mxu0 %v978
    %1442 = vmatpush.bf16.msra.mxu0 %v974
    %1443 = vmatpush.bf16.msra.mxu0 %v970
    %1444 = vmatpush.bf16.msra.mxu0 %v966
    %1445 = vmatpush.bf16.msra.mxu0 %v962
    %1446 = vmatpush.bf16.msra.mxu0 %v958
    %1447 = vmatpush.bf16.msra.mxu0 %v954
    %1448 = vmatmul.bf16.gmra.mxu0 %v152
    %v1449 = vpop.f32.mrf.mxu0
    %v1450 = vadd.f32 %v358, %v1449
    %v1451 = vpop.f32.mrf.mxu0
    %1452 = vdwg.mxu0
    %1453 = vmatpush.bf16.msra.mxu0 %v1014
    %1454 = vmatpush.bf16.msra.mxu0 %v1010
    %1455 = vmatpush.bf16.msra.mxu0 %v1006
    %1456 = vmatpush.bf16.msra.mxu0 %v1002
    %1457 = vmatpush.bf16.msra.mxu0 %v998
    %1458 = vmatpush.bf16.msra.mxu0 %v994
    %1459 = vmatpush.bf16.msra.mxu0 %v990
    %1460 = vmatpush.bf16.msra.mxu0 %v986
    %1461 = vmatmul.bf16.gmra.mxu0 %v153
    %v1462 = vpop.f32.mrf.mxu0
    %v1463 = vadd.f32 %v1450, %v1462
    %v1464 = vpop.f32.mrf.mxu0
    %1465 = vdwg.mxu0
    %1466 = vmatpush.bf16.msra.mxu0 %v1046
    %1467 = vmatpush.bf16.msra.mxu0 %v1042
    %1468 = vmatpush.bf16.msra.mxu0 %v1038
    %1469 = vmatpush.bf16.msra.mxu0 %v1034
    %1470 = vmatpush.bf16.msra.mxu0 %v1030
    %1471 = vmatpush.bf16.msra.mxu0 %v1026
    %1472 = vmatpush.bf16.msra.mxu0 %v1022
    %1473 = vmatpush.bf16.msra.mxu0 %v1018
    %1474 = vmatmul.bf16.gmra.mxu0 %v154
    %v1475 = vpop.f32.mrf.mxu0
    %v1476 = vadd.f32 %v1463, %v1475
    %v1477 = vpop.f32.mrf.mxu0
    %1478 = vdwg.mxu0
    %1479 = vmatpush.bf16.msra.mxu0 %v1078
    %1480 = vmatpush.bf16.msra.mxu0 %v1074
    %1481 = vmatpush.bf16.msra.mxu0 %v1070
    %1482 = vmatpush.bf16.msra.mxu0 %v1066
    %1483 = vmatpush.bf16.msra.mxu0 %v1062
    %1484 = vmatpush.bf16.msra.mxu0 %v1058
    %1485 = vmatpush.bf16.msra.mxu0 %v1054
    %1486 = vmatpush.bf16.msra.mxu0 %v1050
    %1487 = vmatmul.bf16.gmra.mxu0 %v155
    %v1488 = vpop.f32.mrf.mxu0
    %v1489 = vadd.f32 %v1476, %v1488
    %v1490 = vpop.f32.mrf.mxu0
    %1491 = vdwg.mxu0
    %1492 = vmatpush.bf16.msra.mxu0 %v1110
    %1493 = vmatpush.bf16.msra.mxu0 %v1106
    %1494 = vmatpush.bf16.msra.mxu0 %v1102
    %1495 = vmatpush.bf16.msra.mxu0 %v1098
    %1496 = vmatpush.bf16.msra.mxu0 %v1094
    %1497 = vmatpush.bf16.msra.mxu0 %v1090
    %1498 = vmatpush.bf16.msra.mxu0 %v1086
    %1499 = vmatpush.bf16.msra.mxu0 %v1082
    %1500 = vmatmul.bf16.gmra.mxu0 %v156
    %v1501 = vpop.f32.mrf.mxu0
    %v1502 = vadd.f32 %v1489, %v1501
    %v1503 = vpop.f32.mrf.mxu0
    %1504 = vdwg.mxu0
    %1505 = vmatpush.bf16.msra.mxu0 %v1142
    %1506 = vmatpush.bf16.msra.mxu0 %v1138
    %1507 = vmatpush.bf16.msra.mxu0 %v1134
    %1508 = vmatpush.bf16.msra.mxu0 %v1130
    %1509 = vmatpush.bf16.msra.mxu0 %v1126
    %1510 = vmatpush.bf16.msra.mxu0 %v1122
    %1511 = vmatpush.bf16.msra.mxu0 %v1118
    %1512 = vmatpush.bf16.msra.mxu0 %v1114
    %1513 = vmatmul.bf16.gmra.mxu0 %v157
    %v1514 = vpop.f32.mrf.mxu0
    %v1515 = vadd.f32 %v1502, %v1514
    %v1516 = vpop.f32.mrf.mxu0
    %1517 = vdwg.mxu0
    %1518 = vmatpush.bf16.msra.mxu0 0
    %1519 = vmatpush.bf16.msra.mxu0 0
    %1520 = vmatpush.bf16.msra.mxu0 0
    %1521 = vmatpush.bf16.msra.mxu0 0
    %1522 = vmatpush.bf16.msra.mxu0 0
    %1523 = vmatpush.bf16.msra.mxu0 0
    %1524 = vmatpush.bf16.msra.mxu0 0
    %1525 = vmatpush.bf16.msra.mxu0 %v1146
    %1526 = vmatmul.bf16.gmra.mxu0 %v1347
    %v1527 = vpop.f32.mrf.mxu0
    %v1528 = vadd.f32 %v1515, %v1527
    %v1529 = vpop.f32.mrf.mxu0
    %1530 = vdwg.mxu0
    %1531 = vmatpush.bf16.msra.mxu0 %v983
    %1532 = vmatpush.bf16.msra.mxu0 %v979
    %1533 = vmatpush.bf16.msra.mxu0 %v975
    %1534 = vmatpush.bf16.msra.mxu0 %v971
    %1535 = vmatpush.bf16.msra.mxu0 %v967
    %1536 = vmatpush.bf16.msra.mxu0 %v963
    %1537 = vmatpush.bf16.msra.mxu0 %v959
    %1538 = vmatpush.bf16.msra.mxu0 %v955
    %1539 = vmatmul.bf16.gmra.mxu0 %v152
    %v1540 = vpop.f32.mrf.mxu0
    %v1541 = vadd.f32 %v359, %v1540
    %v1542 = vpop.f32.mrf.mxu0
    %1543 = vdwg.mxu0
    %1544 = vmatpush.bf16.msra.mxu0 %v1015
    %1545 = vmatpush.bf16.msra.mxu0 %v1011
    %1546 = vmatpush.bf16.msra.mxu0 %v1007
    %1547 = vmatpush.bf16.msra.mxu0 %v1003
    %1548 = vmatpush.bf16.msra.mxu0 %v999
    %1549 = vmatpush.bf16.msra.mxu0 %v995
    %1550 = vmatpush.bf16.msra.mxu0 %v991
    %1551 = vmatpush.bf16.msra.mxu0 %v987
    %1552 = vmatmul.bf16.gmra.mxu0 %v153
    %v1553 = vpop.f32.mrf.mxu0
    %v1554 = vadd.f32 %v1541, %v1553
    %v1555 = vpop.f32.mrf.mxu0
    %1556 = vdwg.mxu0
    %1557 = vmatpush.bf16.msra.mxu0 %v1047
    %1558 = vmatpush.bf16.msra.mxu0 %v1043
    %1559 = vmatpush.bf16.msra.mxu0 %v1039
    %1560 = vmatpush.bf16.msra.mxu0 %v1035
    %1561 = vmatpush.bf16.msra.mxu0 %v1031
    %1562 = vmatpush.bf16.msra.mxu0 %v1027
    %1563 = vmatpush.bf16.msra.mxu0 %v1023
    %1564 = vmatpush.bf16.msra.mxu0 %v1019
    %1565 = vmatmul.bf16.gmra.mxu0 %v154
    %v1566 = vpop.f32.mrf.mxu0
    %v1567 = vadd.f32 %v1554, %v1566
    %v1568 = vpop.f32.mrf.mxu0
    %1569 = vdwg.mxu0
    %1570 = vmatpush.bf16.msra.mxu0 %v1079
    %1571 = vmatpush.bf16.msra.mxu0 %v1075
    %1572 = vmatpush.bf16.msra.mxu0 %v1071
    %1573 = vmatpush.bf16.msra.mxu0 %v1067
    %1574 = vmatpush.bf16.msra.mxu0 %v1063
    %1575 = vmatpush.bf16.msra.mxu0 %v1059
    %1576 = vmatpush.bf16.msra.mxu0 %v1055
    %1577 = vmatpush.bf16.msra.mxu0 %v1051
    %1578 = vmatmul.bf16.gmra.mxu0 %v155
    %v1579 = vpop.f32.mrf.mxu0
    %v1580 = vadd.f32 %v1567, %v1579
    %v1581 = vpop.f32.mrf.mxu0
    %1582 = vdwg.mxu0
    %1583 = vmatpush.bf16.msra.mxu0 %v1111
    %1584 = vmatpush.bf16.msra.mxu0 %v1107
    %1585 = vmatpush.bf16.msra.mxu0 %v1103
    %1586 = vmatpush.bf16.msra.mxu0 %v1099
    %1587 = vmatpush.bf16.msra.mxu0 %v1095
    %1588 = vmatpush.bf16.msra.mxu0 %v1091
    %1589 = vmatpush.bf16.msra.mxu0 %v1087
    %1590 = vmatpush.bf16.msra.mxu0 %v1083
    %1591 = vmatmul.bf16.gmra.mxu0 %v156
    %v1592 = vpop.f32.mrf.mxu0
    %v1593 = vadd.f32 %v1580, %v1592
    %v1594 = vpop.f32.mrf.mxu0
    %1595 = vdwg.mxu0
    %1596 = vmatpush.bf16.msra.mxu0 %v1143
    %1597 = vmatpush.bf16.msra.mxu0 %v1139
    %1598 = vmatpush.bf16.msra.mxu0 %v1135
    %1599 = vmatpush.bf16.msra.mxu0 %v1131
    %1600 = vmatpush.bf16.msra.mxu0 %v1127
    %1601 = vmatpush.bf16.msra.mxu0 %v1123
    %1602 = vmatpush.bf16.msra.mxu0 %v1119
    %1603 = vmatpush.bf16.msra.mxu0 %v1115
    %1604 = vmatmul.bf16.gmra.mxu0 %v157
    %v1605 = vpop.f32.mrf.mxu0
    %v1606 = vadd.f32 %v1593, %v1605
    %v1607 = vpop.f32.mrf.mxu0
    %1608 = vdwg.mxu0
    %1609 = vmatpush.bf16.msra.mxu0 0
    %1610 = vmatpush.bf16.msra.mxu0 0
    %1611 = vmatpush.bf16.msra.mxu0 0
    %1612 = vmatpush.bf16.msra.mxu0 0
    %1613 = vmatpush.bf16.msra.mxu0 0
    %1614 = vmatpush.bf16.msra.mxu0 0
    %1615 = vmatpush.bf16.msra.mxu0 0
    %1616 = vmatpush.bf16.msra.mxu0 %v1147
    %1617 = vmatmul.bf16.gmra.mxu0 %v1347
    %v1618 = vpop.f32.mrf.mxu0
    %v1619 = vadd.f32 %v1606, %v1618
    %v1620 = vpop.f32.mrf.mxu0
    %1621 = vdwg.mxu0
    %1622 = vmatpush.bf16.msra.mxu0 %v984
    %1623 = vmatpush.bf16.msra.mxu0 %v980
    %1624 = vmatpush.bf16.msra.mxu0 %v976
    %1625 = vmatpush.bf16.msra.mxu0 %v972
    %1626 = vmatpush.bf16.msra.mxu0 %v968
    %1627 = vmatpush.bf16.msra.mxu0 %v964
    %1628 = vmatpush.bf16.msra.mxu0 %v960
    %1629 = vmatpush.bf16.msra.mxu0 %v956
    %1630 = vmatmul.bf16.gmra.mxu0 %v152
    %v1631 = vpop.f32.mrf.mxu0
    %v1632 = vadd.f32 %v360, %v1631
    %v1633 = vpop.f32.mrf.mxu0
    %1634 = vdwg.mxu0
    %1635 = vmatpush.bf16.msra.mxu0 %v1016
    %1636 = vmatpush.bf16.msra.mxu0 %v1012
    %1637 = vmatpush.bf16.msra.mxu0 %v1008
    %1638 = vmatpush.bf16.msra.mxu0 %v1004
    %1639 = vmatpush.bf16.msra.mxu0 %v1000
    %1640 = vmatpush.bf16.msra.mxu0 %v996
    %1641 = vmatpush.bf16.msra.mxu0 %v992
    %1642 = vmatpush.bf16.msra.mxu0 %v988
    %1643 = vmatmul.bf16.gmra.mxu0 %v153
    %v1644 = vpop.f32.mrf.mxu0
    %v1645 = vadd.f32 %v1632, %v1644
    %v1646 = vpop.f32.mrf.mxu0
    %1647 = vdwg.mxu0
    %1648 = vmatpush.bf16.msra.mxu0 %v1048
    %1649 = vmatpush.bf16.msra.mxu0 %v1044
    %1650 = vmatpush.bf16.msra.mxu0 %v1040
    %1651 = vmatpush.bf16.msra.mxu0 %v1036
    %1652 = vmatpush.bf16.msra.mxu0 %v1032
    %1653 = vmatpush.bf16.msra.mxu0 %v1028
    %1654 = vmatpush.bf16.msra.mxu0 %v1024
    %1655 = vmatpush.bf16.msra.mxu0 %v1020
    %1656 = vmatmul.bf16.gmra.mxu0 %v154
    %v1657 = vpop.f32.mrf.mxu0
    %v1658 = vadd.f32 %v1645, %v1657
    %v1659 = vpop.f32.mrf.mxu0
    %1660 = vdwg.mxu0
    %1661 = vmatpush.bf16.msra.mxu0 %v1080
    %1662 = vmatpush.bf16.msra.mxu0 %v1076
    %1663 = vmatpush.bf16.msra.mxu0 %v1072
    %1664 = vmatpush.bf16.msra.mxu0 %v1068
    %1665 = vmatpush.bf16.msra.mxu0 %v1064
    %1666 = vmatpush.bf16.msra.mxu0 %v1060
    %1667 = vmatpush.bf16.msra.mxu0 %v1056
    %1668 = vmatpush.bf16.msra.mxu0 %v1052
    %1669 = vmatmul.bf16.gmra.mxu0 %v155
    %v1670 = vpop.f32.mrf.mxu0
    %v1671 = vadd.f32 %v1658, %v1670
    %v1672 = vpop.f32.mrf.mxu0
    %1673 = vdwg.mxu0
    %1674 = vmatpush.bf16.msra.mxu0 %v1112
    %1675 = vmatpush.bf16.msra.mxu0 %v1108
    %1676 = vmatpush.bf16.msra.mxu0 %v1104
    %1677 = vmatpush.bf16.msra.mxu0 %v1100
    %1678 = vmatpush.bf16.msra.mxu0 %v1096
    %1679 = vmatpush.bf16.msra.mxu0 %v1092
    %1680 = vmatpush.bf16.msra.mxu0 %v1088
    %1681 = vmatpush.bf16.msra.mxu0 %v1084
    %1682 = vmatmul.bf16.gmra.mxu0 %v156
    %v1683 = vpop.f32.mrf.mxu0
    %v1684 = vadd.f32 %v1671, %v1683
    %v1685 = vpop.f32.mrf.mxu0
    %1686 = vdwg.mxu0
    %1687 = vmatpush.bf16.msra.mxu0 %v1144
    %1688 = vmatpush.bf16.msra.mxu0 %v1140
    %1689 = vmatpush.bf16.msra.mxu0 %v1136
    %1690 = vmatpush.bf16.msra.mxu0 %v1132
    %1691 = vmatpush.bf16.msra.mxu0 %v1128
    %1692 = vmatpush.bf16.msra.mxu0 %v1124
    %1693 = vmatpush.bf16.msra.mxu0 %v1120
    %1694 = vmatpush.bf16.msra.mxu0 %v1116
    %1695 = vmatmul.bf16.gmra.mxu0 %v157
    %v1696 = vpop.f32.mrf.mxu0
    %v1697 = vadd.f32 %v1684, %v1696
    %v1698 = vpop.f32.mrf.mxu0
    %1699 = vdwg.mxu0
    %1700 = vmatpush.bf16.msra.mxu0 0
    %1701 = vmatpush.bf16.msra.mxu0 0
    %1702 = vmatpush.bf16.msra.mxu0 0
    %1703 = vmatpush.bf16.msra.mxu0 0
    %1704 = vmatpush.bf16.msra.mxu0 0
    %1705 = vmatpush.bf16.msra.mxu0 0
    %1706 = vmatpush.bf16.msra.mxu0 0
    %1707 = vmatpush.bf16.msra.mxu0 %v1148
    %1708 = vmatmul.bf16.gmra.mxu0 %v1347
    %v1709 = vpop.f32.mrf.mxu0
    %v1710 = vadd.f32 %v1697, %v1709
    %v1711 = vpop.f32.mrf.mxu0
    %1712 = vdwg.mxu0
    %v1713 = vmax.f32 %v1437, 0.0
    %v1714 = vmax.f32 %v1528, 0.0
    %v1715 = vmax.f32 %v1619, 0.0
    %v1716 = vmax.f32 %v1710, 0.0
    %v1717 = vpack.c.bf16 %v1713, %v1713
    %v1718 = vpack.c.bf16 %v1714, %v1714
    %v1719 = vpack.c.bf16 %v1715, %v1715
    %v1720 = vpack.c.bf16 %v1716, %v1716
    %v1721 = vld [vmem:[#allocation8] sm:$0xff]
    %v1722 = vld [vmem:[#allocation8 + $0x8] sm:$0xff]
    %v1723 = vld [vmem:[#allocation8 + $0x10] sm:$0xff]
    %v1724 = vld [vmem:[#allocation8 + $0x18] sm:$0xff]
    %v1725 = vld [vmem:[#allocation8 + $0x20] sm:$0xff]
    %v1726 = vld [vmem:[#allocation8 + $0x28] sm:$0xff]
    %v1727 = vld [vmem:[#allocation8 + $0x30] sm:$0xff]
    %v1728 = vld [vmem:[#allocation8 + $0x38] sm:$0xff]
    %v1729 = vld [vmem:[#allocation8 + $0x40] sm:$0xff]
    %v1730 = vld [vmem:[#allocation8 + $0x48] sm:$0xff]
    %v1731 = vld [vmem:[#allocation8 + $0x50] sm:$0xff]
    %v1732 = vld [vmem:[#allocation8 + $0x58] sm:$0xff]
    %v1733 = vld [vmem:[#allocation8 + $0x60] sm:$0xff]
    %v1734 = vld [vmem:[#allocation8 + $0x68] sm:$0xff]
    %v1735 = vld [vmem:[#allocation8 + $0x70] sm:$0xff]
    %v1736 = vld [vmem:[#allocation8 + $0x78] sm:$0xff]
    %v1737 = vld [vmem:[#allocation8 + $0x80] sm:$0xff]
    %v1738 = vld [vmem:[#allocation8 + $0x88] sm:$0xff]
    %v1739 = vld [vmem:[#allocation8 + $0x90] sm:$0xff]
    %v1740 = vld [vmem:[#allocation8 + $0x98] sm:$0xff]
    %v1741 = vld [vmem:[#allocation8 + $0xa0] sm:$0xff]
    %v1742 = vld [vmem:[#allocation8 + $0xa8] sm:$0xff]
    %v1743 = vld [vmem:[#allocation8 + $0xb0] sm:$0xff]
    %v1744 = vld [vmem:[#allocation8 + $0xb8] sm:$0xff]
    %v1745 = vld [vmem:[#allocation8 + $0xc0] sm:$0xff]
    %v1746 = vld [vmem:[#allocation8 + $0xc8] sm:$0xff]
    %v1747 = vld [vmem:[#allocation8 + $0xd0] sm:$0xff]
    %v1748 = vld [vmem:[#allocation8 + $0xd8] sm:$0xff]
    %v1749 = vld [vmem:[#allocation8 + $0xe0] sm:$0xff]
    %v1750 = vld [vmem:[#allocation8 + $0xe8] sm:$0xff]
    %v1751 = vld [vmem:[#allocation8 + $0xf0] sm:$0xff]
    %v1752 = vld [vmem:[#allocation8 + $0xf8] sm:$0xff]
    %v1753 = vld [vmem:[#allocation8 + $0x100] sm:$0xff]
    %v1754 = vld [vmem:[#allocation8 + $0x108] sm:$0xff]
    %v1755 = vld [vmem:[#allocation8 + $0x110] sm:$0xff]
    %v1756 = vld [vmem:[#allocation8 + $0x118] sm:$0xff]
    %v1757 = vld [vmem:[#allocation8 + $0x120] sm:$0xff]
    %v1758 = vld [vmem:[#allocation8 + $0x128] sm:$0xff]
    %v1759 = vld [vmem:[#allocation8 + $0x130] sm:$0xff]
    %v1760 = vld [vmem:[#allocation8 + $0x138] sm:$0xff]
    %v1761 = vld [vmem:[#allocation8 + $0x140] sm:$0xff]
    %v1762 = vld [vmem:[#allocation8 + $0x148] sm:$0xff]
    %v1763 = vld [vmem:[#allocation8 + $0x150] sm:$0xff]
    %v1764 = vld [vmem:[#allocation8 + $0x158] sm:$0xff]
    %v1765 = vld [vmem:[#allocation8 + $0x160] sm:$0xff]
    %v1766 = vld [vmem:[#allocation8 + $0x168] sm:$0xff]
    %v1767 = vld [vmem:[#allocation8 + $0x170] sm:$0xff]
    %v1768 = vld [vmem:[#allocation8 + $0x178] sm:$0xff]
    %v1769 = vld [vmem:[#allocation8 + $0x180] sm:$0xff]
    %v1770 = vld [vmem:[#allocation8 + $0x188] sm:$0xff]
    %v1771 = vld [vmem:[#allocation8 + $0x190] sm:$0xff]
    %v1772 = vld [vmem:[#allocation8 + $0x198] sm:$0xff]
    %v1773 = vld [vmem:[#allocation8 + $0x1a0] sm:$0xff]
    %v1774 = vld [vmem:[#allocation8 + $0x1a8] sm:$0xff]
    %v1775 = vld [vmem:[#allocation8 + $0x1b0] sm:$0xff]
    %v1776 = vld [vmem:[#allocation8 + $0x1b8] sm:$0xff]
    %v1777 = vld [vmem:[#allocation8 + $0x1c0] sm:$0xff]
    %v1778 = vld [vmem:[#allocation8 + $0x1c8] sm:$0xff]
    %v1779 = vld [vmem:[#allocation8 + $0x1d0] sm:$0xff]
    %v1780 = vld [vmem:[#allocation8 + $0x1d8] sm:$0xff]
    %v1781 = vld [vmem:[#allocation8 + $0x1e0] sm:$0xff]
    %v1782 = vld [vmem:[#allocation8 + $0x1e8] sm:$0xff]
    %v1783 = vld [vmem:[#allocation8 + $0x1f0] sm:$0xff]
    %v1784 = vld [vmem:[#allocation8 + $0x1f8] sm:$0xff]
    %v1785 = vld [vmem:[%s4] sm:$0x3]
    %v1787 = vperm.slane %v1785, 0
    %v1788 = vperm.slane %v1785, 1
    %v1855 = vunpack.c.l.b16 %v1721
    %v1856 = vunpack.c.h.b16 %v1721
    %v1857 = vunpack.c.l.b16 %v1722
    %v1858 = vunpack.c.h.b16 %v1722
    %v1859 = vunpack.c.l.b16 %v1723
    %v1860 = vunpack.c.h.b16 %v1723
    %v1861 = vunpack.c.l.b16 %v1724
    %v1862 = vunpack.c.h.b16 %v1724
    %v1863 = vunpack.c.l.b16 %v1725
    %v1864 = vunpack.c.h.b16 %v1725
    %v1865 = vunpack.c.l.b16 %v1726
    %v1866 = vunpack.c.h.b16 %v1726
    %v1867 = vunpack.c.l.b16 %v1727
    %v1868 = vunpack.c.h.b16 %v1727
    %v1869 = vunpack.c.l.b16 %v1728
    %v1870 = vunpack.c.h.b16 %v1728
    %v1871 = vunpack.c.l.b16 %v1729
    %v1872 = vunpack.c.h.b16 %v1729
    %v1873 = vunpack.c.l.b16 %v1730
    %v1874 = vunpack.c.h.b16 %v1730
    %v1875 = vunpack.c.l.b16 %v1731
    %v1876 = vunpack.c.h.b16 %v1731
    %v1877 = vunpack.c.l.b16 %v1732
    %v1878 = vunpack.c.h.b16 %v1732
    %v1879 = vunpack.c.l.b16 %v1733
    %v1880 = vunpack.c.h.b16 %v1733
    %v1881 = vunpack.c.l.b16 %v1734
    %v1882 = vunpack.c.h.b16 %v1734
    %v1883 = vunpack.c.l.b16 %v1735
    %v1884 = vunpack.c.h.b16 %v1735
    %v1885 = vunpack.c.l.b16 %v1736
    %v1886 = vunpack.c.h.b16 %v1736
    %v1887 = vunpack.c.l.b16 %v1737
    %v1888 = vunpack.c.h.b16 %v1737
    %v1889 = vunpack.c.l.b16 %v1738
    %v1890 = vunpack.c.h.b16 %v1738
    %v1891 = vunpack.c.l.b16 %v1739
    %v1892 = vunpack.c.h.b16 %v1739
    %v1893 = vunpack.c.l.b16 %v1740
    %v1894 = vunpack.c.h.b16 %v1740
    %v1895 = vunpack.c.l.b16 %v1741
    %v1896 = vunpack.c.h.b16 %v1741
    %v1897 = vunpack.c.l.b16 %v1742
    %v1898 = vunpack.c.h.b16 %v1742
    %v1899 = vunpack.c.l.b16 %v1743
    %v1900 = vunpack.c.h.b16 %v1743
    %v1901 = vunpack.c.l.b16 %v1744
    %v1902 = vunpack.c.h.b16 %v1744
    %v1903 = vunpack.c.l.b16 %v1745
    %v1904 = vunpack.c.h.b16 %v1745
    %v1905 = vunpack.c.l.b16 %v1746
    %v1906 = vunpack.c.h.b16 %v1746
    %v1907 = vunpack.c.l.b16 %v1747
    %v1908 = vunpack.c.h.b16 %v1747
    %v1909 = vunpack.c.l.b16 %v1748
    %v1910 = vunpack.c.h.b16 %v1748
    %v1911 = vunpack.c.l.b16 %v1749
    %v1912 = vunpack.c.h.b16 %v1749
    %v1913 = vunpack.c.l.b16 %v1750
    %v1914 = vunpack.c.h.b16 %v1750
    %v1915 = vunpack.c.l.b16 %v1751
    %v1916 = vunpack.c.h.b16 %v1751
    %v1917 = vunpack.c.l.b16 %v1752
    %v1918 = vunpack.c.h.b16 %v1752
    %v1919 = vunpack.c.l.b16 %v1753
    %v1920 = vunpack.c.h.b16 %v1753
    %v1921 = vunpack.c.l.b16 %v1754
    %v1922 = vunpack.c.h.b16 %v1754
    %v1923 = vunpack.c.l.b16 %v1755
    %v1924 = vunpack.c.h.b16 %v1755
    %v1925 = vunpack.c.l.b16 %v1756
    %v1926 = vunpack.c.h.b16 %v1756
    %v1927 = vunpack.c.l.b16 %v1757
    %v1928 = vunpack.c.h.b16 %v1757
    %v1929 = vunpack.c.l.b16 %v1758
    %v1930 = vunpack.c.h.b16 %v1758
    %v1931 = vunpack.c.l.b16 %v1759
    %v1932 = vunpack.c.h.b16 %v1759
    %v1933 = vunpack.c.l.b16 %v1760
    %v1934 = vunpack.c.h.b16 %v1760
    %v1935 = vunpack.c.l.b16 %v1761
    %v1936 = vunpack.c.h.b16 %v1761
    %v1937 = vunpack.c.l.b16 %v1762
    %v1938 = vunpack.c.h.b16 %v1762
    %v1939 = vunpack.c.l.b16 %v1763
    %v1940 = vunpack.c.h.b16 %v1763
    %v1941 = vunpack.c.l.b16 %v1764
    %v1942 = vunpack.c.h.b16 %v1764
    %v1943 = vunpack.c.l.b16 %v1765
    %v1944 = vunpack.c.h.b16 %v1765
    %v1945 = vunpack.c.l.b16 %v1766
    %v1946 = vunpack.c.h.b16 %v1766
    %v1947 = vunpack.c.l.b16 %v1767
    %v1948 = vunpack.c.h.b16 %v1767
    %v1949 = vunpack.c.l.b16 %v1768
    %v1950 = vunpack.c.h.b16 %v1768
    %v1951 = vunpack.c.l.b16 %v1769
    %v1952 = vunpack.c.h.b16 %v1769
    %v1953 = vunpack.c.l.b16 %v1770
    %v1954 = vunpack.c.h.b16 %v1770
    %v1955 = vunpack.c.l.b16 %v1771
    %v1956 = vunpack.c.h.b16 %v1771
    %v1957 = vunpack.c.l.b16 %v1772
    %v1958 = vunpack.c.h.b16 %v1772
    %v1959 = vunpack.c.l.b16 %v1773
    %v1960 = vunpack.c.h.b16 %v1773
    %v1961 = vunpack.c.l.b16 %v1774
    %v1962 = vunpack.c.h.b16 %v1774
    %v1963 = vunpack.c.l.b16 %v1775
    %v1964 = vunpack.c.h.b16 %v1775
    %v1965 = vunpack.c.l.b16 %v1776
    %v1966 = vunpack.c.h.b16 %v1776
    %v1967 = vunpack.c.l.b16 %v1777
    %v1968 = vunpack.c.h.b16 %v1777
    %v1969 = vunpack.c.l.b16 %v1778
    %v1970 = vunpack.c.h.b16 %v1778
    %v1971 = vunpack.c.l.b16 %v1779
    %v1972 = vunpack.c.h.b16 %v1779
    %v1973 = vunpack.c.l.b16 %v1780
    %v1974 = vunpack.c.h.b16 %v1780
    %v1975 = vunpack.c.l.b16 %v1781
    %v1976 = vunpack.c.h.b16 %v1781
    %v1977 = vunpack.c.l.b16 %v1782
    %v1978 = vunpack.c.h.b16 %v1782
    %v1979 = vunpack.c.l.b16 %v1783
    %v1980 = vunpack.c.h.b16 %v1783
    %v1981 = vunpack.c.l.b16 %v1784
    %v1982 = vunpack.c.h.b16 %v1784
    %v1983 = vpack.c.b16 %v1857, %v1855
    %v1984 = vpack.c.b16 %v1858, %v1856
    %v1985 = vpack.c.b16 %v1861, %v1859
    %v1986 = vpack.c.b16 %v1862, %v1860
    %v1987 = vpack.c.b16 %v1865, %v1863
    %v1988 = vpack.c.b16 %v1866, %v1864
    %v1989 = vpack.c.b16 %v1869, %v1867
    %v1990 = vpack.c.b16 %v1870, %v1868
    %v1991 = vpack.c.b16 %v1873, %v1871
    %v1992 = vpack.c.b16 %v1874, %v1872
    %v1993 = vpack.c.b16 %v1877, %v1875
    %v1994 = vpack.c.b16 %v1878, %v1876
    %v1995 = vpack.c.b16 %v1881, %v1879
    %v1996 = vpack.c.b16 %v1882, %v1880
    %v1997 = vpack.c.b16 %v1885, %v1883
    %v1998 = vpack.c.b16 %v1886, %v1884
    %v1999 = vpack.c.b16 %v1889, %v1887
    %v2000 = vpack.c.b16 %v1890, %v1888
    %v2001 = vpack.c.b16 %v1893, %v1891
    %v2002 = vpack.c.b16 %v1894, %v1892
    %v2003 = vpack.c.b16 %v1897, %v1895
    %v2004 = vpack.c.b16 %v1898, %v1896
    %v2005 = vpack.c.b16 %v1901, %v1899
    %v2006 = vpack.c.b16 %v1902, %v1900
    %v2007 = vpack.c.b16 %v1905, %v1903
    %v2008 = vpack.c.b16 %v1906, %v1904
    %v2009 = vpack.c.b16 %v1909, %v1907
    %v2010 = vpack.c.b16 %v1910, %v1908
    %v2011 = vpack.c.b16 %v1913, %v1911
    %v2012 = vpack.c.b16 %v1914, %v1912
    %v2013 = vpack.c.b16 %v1917, %v1915
    %v2014 = vpack.c.b16 %v1918, %v1916
    %v2015 = vpack.c.b16 %v1921, %v1919
    %v2016 = vpack.c.b16 %v1922, %v1920
    %v2017 = vpack.c.b16 %v1925, %v1923
    %v2018 = vpack.c.b16 %v1926, %v1924
    %v2019 = vpack.c.b16 %v1929, %v1927
    %v2020 = vpack.c.b16 %v1930, %v1928
    %v2021 = vpack.c.b16 %v1933, %v1931
    %v2022 = vpack.c.b16 %v1934, %v1932
    %v2023 = vpack.c.b16 %v1937, %v1935
    %v2024 = vpack.c.b16 %v1938, %v1936
    %v2025 = vpack.c.b16 %v1941, %v1939
    %v2026 = vpack.c.b16 %v1942, %v1940
    %v2027 = vpack.c.b16 %v1945, %v1943
    %v2028 = vpack.c.b16 %v1946, %v1944
    %v2029 = vpack.c.b16 %v1949, %v1947
    %v2030 = vpack.c.b16 %v1950, %v1948
    %v2031 = vpack.c.b16 %v1953, %v1951
    %v2032 = vpack.c.b16 %v1954, %v1952
    %v2033 = vpack.c.b16 %v1957, %v1955
    %v2034 = vpack.c.b16 %v1958, %v1956
    %v2035 = vpack.c.b16 %v1961, %v1959
    %v2036 = vpack.c.b16 %v1962, %v1960
    %v2037 = vpack.c.b16 %v1965, %v1963
    %v2038 = vpack.c.b16 %v1966, %v1964
    %v2039 = vpack.c.b16 %v1969, %v1967
    %v2040 = vpack.c.b16 %v1970, %v1968
    %v2041 = vpack.c.b16 %v1973, %v1971
    %v2042 = vpack.c.b16 %v1974, %v1972
    %v2043 = vpack.c.b16 %v1977, %v1975
    %v2044 = vpack.c.b16 %v1978, %v1976
    %v2045 = vpack.c.b16 %v1981, %v1979
    %v2046 = vpack.c.b16 %v1982, %v1980
    %2111 = vmatpush.bf16.msra.mxu0 %v1997
    %2112 = vmatpush.bf16.msra.mxu0 %v1995
    %2113 = vmatpush.bf16.msra.mxu0 %v1993
    %2114 = vmatpush.bf16.msra.mxu0 %v1991
    %2115 = vmatpush.bf16.msra.mxu0 %v1989
    %2116 = vmatpush.bf16.msra.mxu0 %v1987
    %2117 = vmatpush.bf16.msra.mxu0 %v1985
    %2118 = vmatpush.bf16.msra.mxu0 %v1983
    %2119 = vmatmul.bf16.gmra.mxu0 %v1717
    %v2120 = vpop.f32.mrf.mxu0
    %v2121 = vadd.f32 %v1787, %v2120
    %v2122 = vpop.f32.mrf.mxu0
    %2123 = vdwg.mxu0
    %2124 = vmatpush.bf16.msra.mxu0 %v2013
    %2125 = vmatpush.bf16.msra.mxu0 %v2011
    %2126 = vmatpush.bf16.msra.mxu0 %v2009
    %2127 = vmatpush.bf16.msra.mxu0 %v2007
    %2128 = vmatpush.bf16.msra.mxu0 %v2005
    %2129 = vmatpush.bf16.msra.mxu0 %v2003
    %2130 = vmatpush.bf16.msra.mxu0 %v2001
    %2131 = vmatpush.bf16.msra.mxu0 %v1999
    %2132 = vmatmul.bf16.gmra.mxu0 %v1718
    %v2133 = vpop.f32.mrf.mxu0
    %v2134 = vadd.f32 %v2121, %v2133
    %v2135 = vpop.f32.mrf.mxu0
    %2136 = vdwg.mxu0
    %2137 = vmatpush.bf16.msra.mxu0 %v2029
    %2138 = vmatpush.bf16.msra.mxu0 %v2027
    %2139 = vmatpush.bf16.msra.mxu0 %v2025
    %2140 = vmatpush.bf16.msra.mxu0 %v2023
    %2141 = vmatpush.bf16.msra.mxu0 %v2021
    %2142 = vmatpush.bf16.msra.mxu0 %v2019
    %2143 = vmatpush.bf16.msra.mxu0 %v2017
    %2144 = vmatpush.bf16.msra.mxu0 %v2015
    %2145 = vmatmul.bf16.gmra.mxu0 %v1719
    %v2146 = vpop.f32.mrf.mxu0
    %v2147 = vadd.f32 %v2134, %v2146
    %v2148 = vpop.f32.mrf.mxu0
    %2149 = vdwg.mxu0
    %2150 = vmatpush.bf16.msra.mxu0 %v2045
    %2151 = vmatpush.bf16.msra.mxu0 %v2043
    %2152 = vmatpush.bf16.msra.mxu0 %v2041
    %2153 = vmatpush.bf16.msra.mxu0 %v2039
    %2154 = vmatpush.bf16.msra.mxu0 %v2037
    %2155 = vmatpush.bf16.msra.mxu0 %v2035
    %2156 = vmatpush.bf16.msra.mxu0 %v2033
    %2157 = vmatpush.bf16.msra.mxu0 %v2031
    %2158 = vmatmul.bf16.gmra.mxu0 %v1720
    %v2159 = vpop.f32.mrf.mxu0
    %v2160 = vadd.f32 %v2147, %v2159
    %v2161 = vpop.f32.mrf.mxu0
    %2162 = vdwg.mxu0
    %2163 = vmatpush.bf16.msra.mxu0 %v1998
    %2164 = vmatpush.bf16.msra.mxu0 %v1996
    %2165 = vmatpush.bf16.msra.mxu0 %v1994
    %2166 = vmatpush.bf16.msra.mxu0 %v1992
    %2167 = vmatpush.bf16.msra.mxu0 %v1990
    %2168 = vmatpush.bf16.msra.mxu0 %v1988
    %2169 = vmatpush.bf16.msra.mxu0 %v1986
    %2170 = vmatpush.bf16.msra.mxu0 %v1984
    %2171 = vmatmul.bf16.gmra.mxu0 %v1717
    %v2172 = vpop.f32.mrf.mxu0
    %v2173 = vadd.f32 %v1788, %v2172
    %v2174 = vpop.f32.mrf.mxu0
    %2175 = vdwg.mxu0
    %2176 = vmatpush.bf16.msra.mxu0 %v2014
    %2177 = vmatpush.bf16.msra.mxu0 %v2012
    %2178 = vmatpush.bf16.msra.mxu0 %v2010
    %2179 = vmatpush.bf16.msra.mxu0 %v2008
    %2180 = vmatpush.bf16.msra.mxu0 %v2006
    %2181 = vmatpush.bf16.msra.mxu0 %v2004
    %2182 = vmatpush.bf16.msra.mxu0 %v2002
    %2183 = vmatpush.bf16.msra.mxu0 %v2000
    %2184 = vmatmul.bf16.gmra.mxu0 %v1718
    %v2185 = vpop.f32.mrf.mxu0
    %v2186 = vadd.f32 %v2173, %v2185
    %v2187 = vpop.f32.mrf.mxu0
    %2188 = vdwg.mxu0
    %2189 = vmatpush.bf16.msra.mxu0 %v2030
    %2190 = vmatpush.bf16.msra.mxu0 %v2028
    %2191 = vmatpush.bf16.msra.mxu0 %v2026
    %2192 = vmatpush.bf16.msra.mxu0 %v2024
    %2193 = vmatpush.bf16.msra.mxu0 %v2022
    %2194 = vmatpush.bf16.msra.mxu0 %v2020
    %2195 = vmatpush.bf16.msra.mxu0 %v2018
    %2196 = vmatpush.bf16.msra.mxu0 %v2016
    %2197 = vmatmul.bf16.gmra.mxu0 %v1719
    %v2198 = vpop.f32.mrf.mxu0
    %v2199 = vadd.f32 %v2186, %v2198
    %v2200 = vpop.f32.mrf.mxu0
    %2201 = vdwg.mxu0
    %2202 = vmatpush.bf16.msra.mxu0 %v2046
    %2203 = vmatpush.bf16.msra.mxu0 %v2044
    %2204 = vmatpush.bf16.msra.mxu0 %v2042
    %2205 = vmatpush.bf16.msra.mxu0 %v2040
    %2206 = vmatpush.bf16.msra.mxu0 %v2038
    %2207 = vmatpush.bf16.msra.mxu0 %v2036
    %2208 = vmatpush.bf16.msra.mxu0 %v2034
    %2209 = vmatpush.bf16.msra.mxu0 %v2032
    %2210 = vmatmul.bf16.gmra.mxu0 %v1720
    %v2211 = vpop.f32.mrf.mxu0
    %v2212 = vadd.f32 %v2199, %v2211
    %v2213 = vpop.f32.mrf.mxu0
    %2214 = vdwg.mxu0
    %v2215 = vmax.f32 %v2160, 0.0
    %v2216 = vmax.f32 %v2212, 0.0
    %v2217 = vpack.c.bf16 %v2215, %v2215
    %v2218 = vpack.c.bf16 %v2216, %v2216
    %v2219 = vld [vmem:[#allocation10] sm:$0xf]
    %v2220 = vld [vmem:[#allocation10 + $0x4] sm:$0xf]
    %v2221 = vld [vmem:[#allocation10 + $0x8] sm:$0xf]
    %v2222 = vld [vmem:[#allocation10 + $0xc] sm:$0xf]
    %v2223 = vld [vmem:[#allocation10 + $0x10] sm:$0xf]
    %v2224 = vld [vmem:[#allocation10 + $0x14] sm:$0xf]
    %v2225 = vld [vmem:[#allocation10 + $0x18] sm:$0xf]
    %v2226 = vld [vmem:[#allocation10 + $0x1c] sm:$0xf]
    %v2227 = vld [vmem:[#allocation10 + $0x20] sm:$0xf]
    %v2228 = vld [vmem:[#allocation10 + $0x24] sm:$0xf]
    %v2229 = vld [vmem:[#allocation10 + $0x28] sm:$0xf]
    %v2230 = vld [vmem:[#allocation10 + $0x2c] sm:$0xf]
    %v2231 = vld [vmem:[#allocation10 + $0x30] sm:$0xf]
    %v2232 = vld [vmem:[#allocation10 + $0x34] sm:$0xf]
    %v2233 = vld [vmem:[#allocation10 + $0x38] sm:$0xf]
    %v2234 = vld [vmem:[#allocation10 + $0x3c] sm:$0xf]
    %v2235 = vld [vmem:[#allocation10 + $0x40] sm:$0xf]
    %v2236 = vld [vmem:[#allocation10 + $0x44] sm:$0xf]
    %v2237 = vld [vmem:[#allocation10 + $0x48] sm:$0xf]
    %v2238 = vld [vmem:[#allocation10 + $0x4c] sm:$0xf]
    %v2239 = vld [vmem:[#allocation10 + $0x50] sm:$0xf]
    %v2240 = vld [vmem:[#allocation10 + $0x54] sm:$0xf]
    %v2241 = vld [vmem:[#allocation10 + $0x58] sm:$0xf]
    %v2242 = vld [vmem:[#allocation10 + $0x5c] sm:$0xf]
    %v2243 = vld [vmem:[#allocation10 + $0x60] sm:$0xf]
    %v2244 = vld [vmem:[#allocation10 + $0x64] sm:$0xf]
    %v2245 = vld [vmem:[#allocation10 + $0x68] sm:$0xf]
    %v2246 = vld [vmem:[#allocation10 + $0x6c] sm:$0xf]
    %v2247 = vld [vmem:[#allocation10 + $0x70] sm:$0xf]
    %v2248 = vld [vmem:[#allocation10 + $0x74] sm:$0xf]
    %v2249 = vld [vmem:[#allocation10 + $0x78] sm:$0xf]
    %v2250 = vld [vmem:[#allocation10 + $0x7c] sm:$0xf]
    %v2251 = vld [vmem:[%s6] sm:$0x1]
    %v2253 = vperm.slane %v2251, 0
    %v2287 = vunpack.c.l.b16 %v2219
    %v2288 = vunpack.c.l.b16 %v2220
    %v2289 = vunpack.c.l.b16 %v2221
    %v2290 = vunpack.c.l.b16 %v2222
    %v2291 = vunpack.c.l.b16 %v2223
    %v2292 = vunpack.c.l.b16 %v2224
    %v2293 = vunpack.c.l.b16 %v2225
    %v2294 = vunpack.c.l.b16 %v2226
    %v2295 = vunpack.c.l.b16 %v2227
    %v2296 = vunpack.c.l.b16 %v2228
    %v2297 = vunpack.c.l.b16 %v2229
    %v2298 = vunpack.c.l.b16 %v2230
    %v2299 = vunpack.c.l.b16 %v2231
    %v2300 = vunpack.c.l.b16 %v2232
    %v2301 = vunpack.c.l.b16 %v2233
    %v2302 = vunpack.c.l.b16 %v2234
    %v2303 = vunpack.c.l.b16 %v2235
    %v2304 = vunpack.c.l.b16 %v2236
    %v2305 = vunpack.c.l.b16 %v2237
    %v2306 = vunpack.c.l.b16 %v2238
    %v2307 = vunpack.c.l.b16 %v2239
    %v2308 = vunpack.c.l.b16 %v2240
    %v2309 = vunpack.c.l.b16 %v2241
    %v2310 = vunpack.c.l.b16 %v2242
    %v2311 = vunpack.c.l.b16 %v2243
    %v2312 = vunpack.c.l.b16 %v2244
    %v2313 = vunpack.c.l.b16 %v2245
    %v2314 = vunpack.c.l.b16 %v2246
    %v2315 = vunpack.c.l.b16 %v2247
    %v2316 = vunpack.c.l.b16 %v2248
    %v2317 = vunpack.c.l.b16 %v2249
    %v2318 = vunpack.c.l.b16 %v2250
    %v2319 = vpack.c.b16 %v2288, %v2287
    %v2320 = vpack.c.b16 %v2290, %v2289
    %v2321 = vpack.c.b16 %v2292, %v2291
    %v2322 = vpack.c.b16 %v2294, %v2293
    %v2323 = vpack.c.b16 %v2296, %v2295
    %v2324 = vpack.c.b16 %v2298, %v2297
    %v2325 = vpack.c.b16 %v2300, %v2299
    %v2326 = vpack.c.b16 %v2302, %v2301
    %v2327 = vpack.c.b16 %v2304, %v2303
    %v2328 = vpack.c.b16 %v2306, %v2305
    %v2329 = vpack.c.b16 %v2308, %v2307
    %v2330 = vpack.c.b16 %v2310, %v2309
    %v2331 = vpack.c.b16 %v2312, %v2311
    %v2332 = vpack.c.b16 %v2314, %v2313
    %v2333 = vpack.c.b16 %v2316, %v2315
    %v2334 = vpack.c.b16 %v2318, %v2317
    %2351 = vmatpush.bf16.msra.mxu0 %v2326
    %2352 = vmatpush.bf16.msra.mxu0 %v2325
    %2353 = vmatpush.bf16.msra.mxu0 %v2324
    %2354 = vmatpush.bf16.msra.mxu0 %v2323
    %2355 = vmatpush.bf16.msra.mxu0 %v2322
    %2356 = vmatpush.bf16.msra.mxu0 %v2321
    %2357 = vmatpush.bf16.msra.mxu0 %v2320
    %2358 = vmatpush.bf16.msra.mxu0 %v2319
    %2359 = vmatmul.bf16.gmra.mxu0 %v2217
    %v2360 = vpop.f32.mrf.mxu0
    %v2361 = vadd.f32 %v2253, %v2360
    %v2362 = vpop.f32.mrf.mxu0
    %2363 = vdwg.mxu0
    %2364 = vmatpush.bf16.msra.mxu0 %v2334
    %2365 = vmatpush.bf16.msra.mxu0 %v2333
    %2366 = vmatpush.bf16.msra.mxu0 %v2332
    %2367 = vmatpush.bf16.msra.mxu0 %v2331
    %2368 = vmatpush.bf16.msra.mxu0 %v2330
    %2369 = vmatpush.bf16.msra.mxu0 %v2329
    %2370 = vmatpush.bf16.msra.mxu0 %v2328
    %2371 = vmatpush.bf16.msra.mxu0 %v2327
    %2372 = vmatmul.bf16.gmra.mxu0 %v2218
    %v2373 = vpop.f32.mrf.mxu0
    %v2374 = vadd.f32 %v2361, %v2373
    %v2375 = vpop.f32.mrf.mxu0
    %2376 = vdwg.mxu0
    %v2377 = vmax.f32 %v2374, 0.0
    %v2378 = vpack.c.bf16 %v2377, %v2377
    %v2379 = vld [vmem:[#allocation11] sm:$0xf]
    %v2380 = vld [vmem:[#allocation11 + $0x4] sm:$0xf]
    %v2381 = vld [vmem:[#allocation11 + $0x8] sm:$0xf]
    %v2382 = vld [vmem:[#allocation11 + $0xc] sm:$0xf]
    %v2383 = vld [vmem:[#allocation11 + $0x10] sm:$0xf]
    %v2384 = vld [vmem:[#allocation11 + $0x14] sm:$0xf]
    %v2385 = vld [vmem:[#allocation11 + $0x18] sm:$0xf]
    %v2386 = vld [vmem:[#allocation11 + $0x1c] sm:$0xf]
    %v2387 = vld [vmem:[#allocation11 + $0x20] sm:$0xf]
    %v2388 = vld [vmem:[#allocation11 + $0x24] sm:$0xf]
    %v2389 = vld [vmem:[#allocation11 + $0x28] sm:$0xf]
    %v2390 = vld [vmem:[#allocation11 + $0x2c] sm:$0xf]
    %v2391 = vld [vmem:[#allocation11 + $0x30] sm:$0xf]
    %v2392 = vld [vmem:[#allocation11 + $0x34] sm:$0xf]
    %v2393 = vld [vmem:[#allocation11 + $0x38] sm:$0xf]
    %v2394 = vld [vmem:[#allocation11 + $0x3c] sm:$0xf]
    %v2395 = vld [vmem:[%s8] sm:$0x1]
    %v2397 = vperm.slane %v2395, 0
    %v2415 = vunpack.c.l.b16 %v2379
    %v2416 = vunpack.c.l.b16 %v2380
    %v2417 = vunpack.c.l.b16 %v2381
    %v2418 = vunpack.c.l.b16 %v2382
    %v2419 = vunpack.c.l.b16 %v2383
    %v2420 = vunpack.c.l.b16 %v2384
    %v2421 = vunpack.c.l.b16 %v2385
    %v2422 = vunpack.c.l.b16 %v2386
    %v2423 = vunpack.c.l.b16 %v2387
    %v2424 = vunpack.c.l.b16 %v2388
    %v2425 = vunpack.c.l.b16 %v2389
    %v2426 = vunpack.c.l.b16 %v2390
    %v2427 = vunpack.c.l.b16 %v2391
    %v2428 = vunpack.c.l.b16 %v2392
    %v2429 = vunpack.c.l.b16 %v2393
    %v2430 = vunpack.c.l.b16 %v2394
    %v2431 = vpack.c.b16 %v2416, %v2415
    %v2432 = vpack.c.b16 %v2418, %v2417
    %v2433 = vpack.c.b16 %v2420, %v2419
    %v2434 = vpack.c.b16 %v2422, %v2421
    %v2435 = vpack.c.b16 %v2424, %v2423
    %v2436 = vpack.c.b16 %v2426, %v2425
    %v2437 = vpack.c.b16 %v2428, %v2427
    %v2438 = vpack.c.b16 %v2430, %v2429
    %2447 = vmatpush.bf16.msra.mxu0 %v2438
    %2448 = vmatpush.bf16.msra.mxu0 %v2437
    %2449 = vmatpush.bf16.msra.mxu0 %v2436
    %2450 = vmatpush.bf16.msra.mxu0 %v2435
    %2451 = vmatpush.bf16.msra.mxu0 %v2434
    %2452 = vmatpush.bf16.msra.mxu0 %v2433
    %2453 = vmatpush.bf16.msra.mxu0 %v2432
    %2454 = vmatpush.bf16.msra.mxu0 %v2431
    %2455 = vmatmul.bf16.gmra.mxu0 %v2378
    %v2456 = vpop.f32.mrf.mxu0
    %v2457 = vadd.f32 %v2397, %v2456
    %v2458 = vpop.f32.mrf.mxu0
    %2459 = vdwg.mxu0
    %v2460 = vmax.f32 %v2457, 0.0
    %v2461 = vpack.c.bf16 %v2460, %v2460
    %v2462 = vld [vmem:[#allocation13] sm:$0xf]
    %v2463 = vld [vmem:[#allocation13 + $0x4] sm:$0xf]
    %v2464 = vld [vmem:[#allocation13 + $0x8] sm:$0xf]
    %v2465 = vld [vmem:[#allocation13 + $0xc] sm:$0xf]
    %v2466 = vld [vmem:[#allocation13 + $0x10] sm:$0xf]
    %v2467 = vld [vmem:[#allocation13 + $0x14] sm:$0xf]
    %v2468 = vld [vmem:[#allocation13 + $0x18] sm:$0xf]
    %v2469 = vld [vmem:[#allocation13 + $0x1c] sm:$0xf]
    %v2470 = vld [vmem:[#allocation13 + $0x20] sm:$0xf]
    %v2471 = vld [vmem:[#allocation13 + $0x24] sm:$0xf]
    %v2472 = vld [vmem:[#allocation13 + $0x28] sm:$0xf]
    %v2473 = vld [vmem:[#allocation13 + $0x2c] sm:$0xf]
    %v2474 = vld [vmem:[#allocation13 + $0x30] sm:$0xf]
    %v2475 = vld [vmem:[#allocation13 + $0x34] sm:$0xf]
    %v2476 = vld [vmem:[#allocation13 + $0x38] sm:$0xf]
    %v2477 = vld [vmem:[#allocation13 + $0x3c] sm:$0xf]
    %v2478 = vld [vmem:[%s10] sm:$0x1]
    %v2480 = vperm.slane %v2478, 0
    %v2498 = vunpack.c.l.b16 %v2462
    %v2499 = vunpack.c.l.b16 %v2463
    %v2500 = vunpack.c.l.b16 %v2464
    %v2501 = vunpack.c.l.b16 %v2465
    %v2502 = vunpack.c.l.b16 %v2466
    %v2503 = vunpack.c.l.b16 %v2467
    %v2504 = vunpack.c.l.b16 %v2468
    %v2505 = vunpack.c.l.b16 %v2469
    %v2506 = vunpack.c.l.b16 %v2470
    %v2507 = vunpack.c.l.b16 %v2471
    %v2508 = vunpack.c.l.b16 %v2472
    %v2509 = vunpack.c.l.b16 %v2473
    %v2510 = vunpack.c.l.b16 %v2474
    %v2511 = vunpack.c.l.b16 %v2475
    %v2512 = vunpack.c.l.b16 %v2476
    %v2513 = vunpack.c.l.b16 %v2477
    %v2514 = vpack.c.b16 %v2499, %v2498
    %v2515 = vpack.c.b16 %v2501, %v2500
    %v2516 = vpack.c.b16 %v2503, %v2502
    %v2517 = vpack.c.b16 %v2505, %v2504
    %v2518 = vpack.c.b16 %v2507, %v2506
    %v2519 = vpack.c.b16 %v2509, %v2508
    %v2520 = vpack.c.b16 %v2511, %v2510
    %v2521 = vpack.c.b16 %v2513, %v2512
    %2530 = vmatpush.bf16.msra.mxu0 %v2521
    %2531 = vmatpush.bf16.msra.mxu0 %v2520
    %2532 = vmatpush.bf16.msra.mxu0 %v2519
    %2533 = vmatpush.bf16.msra.mxu0 %v2518
    %2534 = vmatpush.bf16.msra.mxu0 %v2517
    %2535 = vmatpush.bf16.msra.mxu0 %v2516
    %2536 = vmatpush.bf16.msra.mxu0 %v2515
    %2537 = vmatpush.bf16.msra.mxu0 %v2514
    %2538 = vmatmul.bf16.gmra.mxu0 %v2461
    %v2539 = vpop.f32.mrf.mxu0
    %v2540 = vadd.f32 %v2480, %v2539
    %v2541 = vpop.f32.mrf.mxu0
    %2542 = vdwg.mxu0
    %2543 = vst [vmem:[#allocation14] sm:$0xff] %v2540
    // Predicated region
    $region74: #{tpu_custom_call.1} parent=1 // pred_check
      _
    $region75: #{tpu_custom_call.1} parent=1 // pred_check_branch
      %2545 = sbr.rel (0) target = $region77
    $region76: #{tpu_custom_call.1} parent=1 // pred_region
      %2547 = vsyncadd [#allocation4], 0
      %s2549 = sshll.u32 [#allocation14], 4
      %s2550 = int_to_ptr.vmem [resolvable:$true] %s2549
      %s2551 = sshll.u32 %s11, 4
      %s2552 = int_to_ptr.hbm [resolvable:$true] %s2551
      %2554 = dma.vmem_to_hbm [thread:$0]  %s2550, 128, %s2552, [#allocation4]
    $region77: #{tpu_custom_call.1} parent=1 // pred_fallthru
      _
    // Predicated region
    $region78: #{tpu_custom_call.1} parent=1 // pred_check
      _
    $region79: #{tpu_custom_call.1} parent=1 // pred_check_branch
      %2556 = sbr.rel (0) target = $region81
    $region80: #{tpu_custom_call.1} parent=1 // pred_region
      %2558 = dma.done [#allocation4], 128
    $region81: #{tpu_custom_call.1} parent=1 // pred_fallthru
      _
    %2559 = vsyncpa [#allocation3], 1
    %2560 = vsyncpa [#allocation6], 1
    %2561 = vsyncpa [#allocation9], 1
    %2562 = vsyncpa [#allocation12], 1
    %2563 = vsyncpa [#allocation4], 1

</llo_original>
